<compile_context>
chip_gen: v6e
topology: v6e:2x2x1
jax: 0.10.0
libtpu: 0.0.40
codegen_flags: <defaults>
</compile_context>

<pallas_src>
import jax
import jax.numpy as jnp
from jax import lax
from jax.experimental import pallas as pl
from jax.experimental.pallas import tpu as pltpu

CONST_RANK_DENOMINATOR = 4


def _make_kernel(compute_dtype):
    """Fused kernel: processes one (B_blk, H, W, Cin) block of images per grid step."""

    def kernel(x_ref, w1_ref, b1_ref, w2_ref, b2_ref, w3_ref, b3_ref, out_ref):
        B, H, W, Cin = x_ref.shape
        Cmid = w1_ref.shape[1]
        Cout = out_ref.shape[3]

        x = x_ref[...]                                     # (B, H, W, Cin) compute dtype
        xf = x.reshape(B * H * W, Cin)

        # --- stage 1: folded (conv1_u ∘ conv1_v ∘ bn1) -> single GEMM + ReLU ---
        t1 = jnp.dot(xf, w1_ref[...], preferred_element_type=jnp.float32) + b1_ref[...]
        t1 = jnp.maximum(t1, 0.0)                          # (B*H*W, Cmid) f32

        # --- stage 2: 3x3 conv (pad=1) as im2col -> single GEMM with K = 9*Cmid,
        #     folded with conv2_v and bn2, then ReLU. Zero-padding and the 9 shifted
        #     views are built as register values (no VMEM scratch round-trip). ---
        t1 = t1.reshape(B, H, W, Cmid)
        zrow = jnp.zeros((B, 1, W, Cmid), jnp.float32)
        tp = jnp.concatenate([zrow, t1, zrow], axis=1)     # (B, H+2, W,   Cmid)
        zcol = jnp.zeros((B, H + 2, 1, Cmid), jnp.float32)
        tp = jnp.concatenate([zcol, tp, zcol], axis=2)     # (B, H+2, W+2, Cmid)
        # tap order k = dy*3 + dx matches w2 row layout (9, Cmid) -> (9*Cmid)
        patches = [tp[:, dy:dy + H, dx:dx + W, :] for dy in range(3) for dx in range(3)]
        pcat = jnp.concatenate(patches, axis=-1).reshape(B * H * W, 9 * Cmid)
        t2 = jnp.dot(pcat.astype(compute_dtype), w2_ref[...],
                     preferred_element_type=jnp.float32) + b2_ref[...]
        t2 = jnp.maximum(t2, 0.0)                          # (B*H*W, Cmid) f32

        # --- stage 3: folded (conv3_u ∘ conv3_v ∘ bn3) -> single GEMM + residual + ReLU ---
        t3 = jnp.dot(t2.astype(compute_dtype), w3_ref[...],
                     preferred_element_type=jnp.float32) + b3_ref[...]
        out = jnp.maximum(t3 + xf.astype(jnp.float32), 0.0)   # identity residual (Cin == Cout)
        out_ref[...] = out.reshape(B, H, W, Cout).astype(out_ref.dtype)

    return kernel


def _pick_batch_block(N, H, W, Cin, Cout, itemsize):
    """Images per grid step: aim for >= 256 matmul rows, stay inside a VMEM budget."""
    rows = H * W
    b = max(1, -(-256 // rows))                                   # ceil(256 / rows)
    per_img = rows * (Cin * itemsize + Cout * 4) * 2              # double-buffered in/out blocks
    per_img += rows * 12 * max(Cin, Cout) * 4                     # rough im2col / intermediate bound
    budget = 12 * 1024 * 1024
    b = max(1, min(b, budget // max(per_img, 1)))
    return min(b, N)


def low_rank_bottleneck(x_nchw, params, *, compute_dtype=jnp.float32, b_blk=None):
    """Wrapper: NCHW in, NCHW (f32) out — PyTorch convention."""
    N, Cin, H, W = x_nchw.shape
    Cmid = params["w1v"].shape[0]
    Cout = params["w3v"].shape[0]
    assert Cin == Cout, "identity residual requires inplanes == planes * expansion"

    # ---- fold low-rank (U, V) pairs + eval-mode BN scale into one GEMM per stage (f32) ----
    w1 = (params["w1v"] @ params["w1u"]).T * params["s1"]                       # (Cin,    Cmid)
    b1 = params["b1v"] * params["s1"] + params["o1"]                            # (1,      Cmid)
    w2 = (params["w2u"].reshape(9 * Cmid, -1) @ params["w2v"].T) * params["s2"] # (9*Cmid, Cmid)
    b2 = params["b2v"] * params["s2"] + params["o2"]                            # (1,      Cmid)
    w3 = (params["w3v"] @ params["w3u"]).T * params["s3"]                       # (Cmid,   Cout)
    b3 = params["b3v"] * params["s3"] + params["o3"]                            # (1,      Cout)

    itemsize = jnp.dtype(compute_dtype).itemsize
    x = jnp.transpose(x_nchw, (0, 2, 3, 1)).astype(compute_dtype)               # NHWC
    w1 = w1.astype(compute_dtype)
    w2 = w2.astype(compute_dtype)
    w3 = w3.astype(compute_dtype)
    b1 = b1.astype(jnp.float32)
    b2 = b2.astype(jnp.float32)
    b3 = b3.astype(jnp.float32)

    if b_blk is None:
        b_blk = _pick_batch_block(N, H, W, Cin, Cout, itemsize)
    n_pad = (-N) % b_blk
    if n_pad:
        x = jnp.pad(x, ((0, n_pad), (0, 0), (0, 0), (0, 0)))
    Np = N + n_pad

    # explicit per-step VMEM footprint estimate -> scoped limit (headroom for bigger shapes)
    weight_bytes = (w1.size + w2.size + w3.size) * itemsize + (b1.size + b2.size + b3.size) * 4
    step_bytes = 2 * b_blk * H * W * (Cin * itemsize + Cout * 4)                # in/out, double buffered
    step_bytes += 2 * weight_bytes
    step_bytes += 2 * b_blk * H * W * (9 * Cmid * 4 + (2 * Cmid + Cout) * 4)    # im2col + intermediates
    vmem_limit = int(min(64 * 1024 * 1024, max(32 * 1024 * 1024, 4 * step_bytes)))

    def wspec(arr):
        nd = arr.ndim
        return pl.BlockSpec(arr.shape, lambda b, _nd=nd: (0,) * _nd)

    out = pl.pallas_call(
        _make_kernel(compute_dtype),
        out_shape=jax.ShapeDtypeStruct((Np, H, W, Cout), jnp.float32),
        grid=(Np // b_blk,),
        in_specs=[
            pl.BlockSpec((b_blk, H, W, Cin), lambda b: (b, 0, 0, 0)),
            wspec(w1), wspec(b1), wspec(w2), wspec(b2), wspec(w3), wspec(b3),
        ],
        out_specs=pl.BlockSpec((b_blk, H, W, Cout), lambda b: (b, 0, 0, 0)),
        compiler_params=pltpu.CompilerParams(
            dimension_semantics=("parallel",),
            vmem_limit_bytes=vmem_limit,
        ),
    )(x, w1, b1, w2, b2, w3, b3)

    if n_pad:
        out = out[:N]
    return jnp.transpose(out, (0, 3, 1, 2))                # back to NCHW


def init_params(key, inplanes, planes, base_width=64, groups=1):
    """Deterministic synthetic parameters matching the module's __init__ shapes."""
    width = int(planes * (base_width / 64.0)) * groups
    R = width // CONST_RANK_DENOMINATOR
    Cout = planes * 4                                      # expansion = 4
    R3 = Cout // CONST_RANK_DENOMINATOR
    ks = jax.random.split(key, 16)

    def nrm(k, shape, scale=0.1):
        return jax.random.normal(k, shape, jnp.float32) * scale

    def bn_fold(k, c):
        k1, k2, k3, k4 = jax.random.split(k, 4)
        gamma = jax.random.uniform(k1, (c,), jnp.float32, 0.5, 1.5)
        beta = nrm(k2, (c,))
        mean = nrm(k3, (c,))
        var = jax.random.uniform(k4, (c,), jnp.float32, 0.5, 1.5)
        s = gamma / jnp.sqrt(var + 1e-5)
        o = beta - mean * s
        return s.reshape(1, c), o.reshape(1, c)

    s1, o1 = bn_fold(ks[0], width)
    s2, o2 = bn_fold(ks[1], width)
    s3, o3 = bn_fold(ks[2], Cout)

    return dict(
        # conv1_u: Conv2d(inplanes, width//4, 1x1) weight squeezed to (R, Cin)
        w1u=nrm(ks[3], (R, inplanes)),
        # conv1_v: Linear(R, width)
        w1v=nrm(ks[4], (width, R)), b1v=nrm(ks[5], (1, width)),
        s1=s1, o1=o1,
        # conv2_u: Conv2d(width, width//4, 3x3) rearranged to (9, width, R),
        # index k = ky*3 + kx  (ky, kx in 0..2)
        w2u=nrm(ks[6], (9, width, R)),
        # conv2_v: Linear(R, width)
        w2v=nrm(ks[7], (width, R)), b2v=nrm(ks[8], (1, width)),
        s2=s2, o2=o2,
        # conv3_u: Conv2d(width, planes, 1x1)
        w3u=nrm(ks[9], (R3, width)),
        # conv3_v: Linear(planes, planes*4)
        w3v=nrm(ks[10], (Cout, R3)), b3v=nrm(ks[11], (1, Cout)),
        s3=s3, o3=o3,
    )


def reference(x_nchw, params):
    """Pure-JAX reference of the same forward pass (unfolded, for verification)."""
    x = jnp.transpose(x_nchw, (0, 2, 3, 1)).astype(jnp.float32)
    N, H, W, Cin = x.shape
    Cmid = params["w1v"].shape[0]
    R = params["w1u"].shape[0]
    Cout = params["w3v"].shape[0]

    xf = x.reshape(N, H * W, Cin)
    t = xf @ params["w1u"].T
    t = t @ params["w1v"].T + params["b1v"]
    t = jnp.maximum(t * params["s1"] + params["o1"], 0.0).reshape(N, H, W, Cmid)

    w2 = params["w2u"].reshape(3, 3, Cmid, R)              # HWIO
    t = lax.conv_general_dilated(t, w2, (1, 1), "SAME",
                                 dimension_numbers=("NHWC", "HWIO", "NHWC"))
    t = t.reshape(N, H * W, R)
    t = t @ params["w2v"].T + params["b2v"]
    t = jnp.maximum(t * params["s2"] + params["o2"], 0.0)

    t = t @ params["w3u"].T
    t = t @ params["w3v"].T + params["b3v"]
    t = t * params["s3"] + params["o3"]
    out = jnp.maximum(t + xf, 0.0)
    return jnp.transpose(out.reshape(N, H, W, Cout), (0, 3, 1, 2))


if __name__ == "__main__":
    key = jax.random.PRNGKey(0)
    kx, kp = jax.random.split(key)

    # small shapes: batch=2, planes=32 => width=32, expansion*planes=128,
    # inplanes=128 (so the identity residual is valid), spatial 8x8.
    N, planes, H, W = 2, 32, 8, 8
    inplanes = planes * 4
    x = jax.random.normal(kx, (N, inplanes, H, W), jnp.float32)
    params = init_params(kp, inplanes, planes)

    ref = reference(x, params)

    # f32 compute path: bit-level-faithful to the module (tight tolerance).
    out_f32 = jax.block_until_ready(low_rank_bottleneck(x, params, compute_dtype=jnp.float32))
    assert out_f32.shape == (N, planes * 4, H, W)
    assert bool(jnp.allclose(out_f32, ref, atol=1e-4, rtol=1e-4)), "f32 kernel mismatch"

    # bf16 MXU-input path (f32 accumulation) — the v5e/v6e/v7x fast path.
    out_bf16 = jax.block_until_ready(low_rank_bottleneck(x, params, compute_dtype=jnp.bfloat16))
    assert out_bf16.shape == (N, planes * 4, H, W)
    assert bool(jnp.allclose(out_bf16, ref, atol=3e-2, rtol=3e-2)), "bf16 kernel mismatch"

    print("KERNEL_OK")
</pallas_src>

<mosaic_0001>
module attributes {stable_mosaic.version = 11 : i64} {
  func.func @kernel(%arg0: i32, %arg1: memref<2x8x8x128xf32, #tpu.memory_space<vmem>>, %arg2: memref<128x32xf32, #tpu.memory_space<vmem>>, %arg3: memref<1x32xf32, #tpu.memory_space<vmem>>, %arg4: memref<288x32xf32, #tpu.memory_space<vmem>>, %arg5: memref<1x32xf32, #tpu.memory_space<vmem>>, %arg6: memref<32x128xf32, #tpu.memory_space<vmem>>, %arg7: memref<1x128xf32, #tpu.memory_space<vmem>>, %arg8: memref<2x8x8x128xf32, #tpu.memory_space<vmem>>) attributes {dimension_semantics = [#tpu.dimension_semantics<parallel>], iteration_bounds = array<i64: 1>, scalar_prefetch = 0 : i64, scratch_operands = 0 : i64, tpu.core_type = #tpu.core_type<tc>, window_params = [{transform_indices = @transform_0, window_bounds = array<i64: 2, 8, 8, 128>}, {pipeline_mode = #tpu.pipeline_mode<synchronous>, transform_indices = @transform_1, window_bounds = array<i64: 128, 32>}, {pipeline_mode = #tpu.pipeline_mode<synchronous>, transform_indices = @transform_2, window_bounds = array<i64: 1, 32>}, {pipeline_mode = #tpu.pipeline_mode<synchronous>, transform_indices = @transform_3, window_bounds = array<i64: 288, 32>}, {pipeline_mode = #tpu.pipeline_mode<synchronous>, transform_indices = @transform_4, window_bounds = array<i64: 1, 32>}, {pipeline_mode = #tpu.pipeline_mode<synchronous>, transform_indices = @transform_5, window_bounds = array<i64: 32, 128>}, {pipeline_mode = #tpu.pipeline_mode<synchronous>, transform_indices = @transform_6, window_bounds = array<i64: 1, 128>}, {transform_indices = @transform_7, window_bounds = array<i64: 2, 8, 8, 128>}]} {
    %c0 = arith.constant 0 : index
    %c0_0 = arith.constant 0 : index
    %c0_1 = arith.constant 0 : index
    %c0_2 = arith.constant 0 : index
    %0 = vector.load %arg1[%c0, %c0_0, %c0_1, %c0_2] : memref<2x8x8x128xf32, #tpu.memory_space<vmem>>, vector<2x8x8x128xf32>
    %1 = vector.shape_cast %0 : vector<2x8x8x128xf32> to vector<128x128xf32>
    %c0_3 = arith.constant 0 : index
    %c0_4 = arith.constant 0 : index
    %2 = vector.load %arg2[%c0_3, %c0_4] : memref<128x32xf32, #tpu.memory_space<vmem>>, vector<128x32xf32>
    %cst = arith.constant dense<0.000000e+00> : vector<128x32xf32>
    %3 = tpu.matmul %1, %2, %cst {dimension_numbers = #tpu.dot_dimension_numbers<[1], [0], [0], [1], [0, 0, 1, 1], [], []>} : vector<128x128xf32>, vector<128x32xf32>, vector<128x32xf32> -> vector<128x32xf32>
    %c0_5 = arith.constant 0 : index
    %c0_6 = arith.constant 0 : index
    %4 = vector.load %arg3[%c0_5, %c0_6] : memref<1x32xf32, #tpu.memory_space<vmem>>, vector<1x32xf32>
    %5 = vector.broadcast %4 : vector<1x32xf32> to vector<128x32xf32>
    %6 = arith.addf %3, %5 : vector<128x32xf32>
    %cst_7 = arith.constant 0.000000e+00 : f32
    %7 = vector.broadcast %cst_7 : f32 to vector<128x32xf32>
    %8 = arith.maximumf %6, %7 : vector<128x32xf32>
    %9 = vector.shape_cast %8 : vector<128x32xf32> to vector<2x8x8x32xf32>
    %cst_8 = arith.constant 0.000000e+00 : f32
    %10 = vector.broadcast %cst_8 : f32 to vector<2x1x8x32xf32>
    %11 = tpu.concatenate %10, %9, %10 in 1 : vector<2x1x8x32xf32>, vector<2x8x8x32xf32>, vector<2x1x8x32xf32> -> vector<2x10x8x32xf32>
    %cst_9 = arith.constant 0.000000e+00 : f32
    %12 = vector.broadcast %cst_9 : f32 to vector<2x10x1x32xf32>
    %13 = tpu.concatenate %12, %11, %12 in 2 : vector<2x10x1x32xf32>, vector<2x10x8x32xf32>, vector<2x10x1x32xf32> -> vector<2x10x10x32xf32>
    %14 = vector.extract_strided_slice %13 {offsets = [0, 0, 0, 0], sizes = [2, 8, 8, 32], strides = [1, 1, 1, 1]} : vector<2x10x10x32xf32> to vector<2x8x8x32xf32>
    %15 = vector.extract_strided_slice %13 {offsets = [0, 0, 1, 0], sizes = [2, 8, 8, 32], strides = [1, 1, 1, 1]} : vector<2x10x10x32xf32> to vector<2x8x8x32xf32>
    %16 = vector.extract_strided_slice %13 {offsets = [0, 0, 2, 0], sizes = [2, 8, 8, 32], strides = [1, 1, 1, 1]} : vector<2x10x10x32xf32> to vector<2x8x8x32xf32>
    %17 = vector.extract_strided_slice %13 {offsets = [0, 1, 0, 0], sizes = [2, 8, 8, 32], strides = [1, 1, 1, 1]} : vector<2x10x10x32xf32> to vector<2x8x8x32xf32>
    %18 = vector.extract_strided_slice %13 {offsets = [0, 1, 1, 0], sizes = [2, 8, 8, 32], strides = [1, 1, 1, 1]} : vector<2x10x10x32xf32> to vector<2x8x8x32xf32>
    %19 = vector.extract_strided_slice %13 {offsets = [0, 1, 2, 0], sizes = [2, 8, 8, 32], strides = [1, 1, 1, 1]} : vector<2x10x10x32xf32> to vector<2x8x8x32xf32>
    %20 = vector.extract_strided_slice %13 {offsets = [0, 2, 0, 0], sizes = [2, 8, 8, 32], strides = [1, 1, 1, 1]} : vector<2x10x10x32xf32> to vector<2x8x8x32xf32>
    %21 = vector.extract_strided_slice %13 {offsets = [0, 2, 1, 0], sizes = [2, 8, 8, 32], strides = [1, 1, 1, 1]} : vector<2x10x10x32xf32> to vector<2x8x8x32xf32>
    %22 = vector.extract_strided_slice %13 {offsets = [0, 2, 2, 0], sizes = [2, 8, 8, 32], strides = [1, 1, 1, 1]} : vector<2x10x10x32xf32> to vector<2x8x8x32xf32>
    %23 = tpu.concatenate %14, %15, %16, %17, %18, %19, %20, %21, %22 in 3 : vector<2x8x8x32xf32>, vector<2x8x8x32xf32>, vector<2x8x8x32xf32>, vector<2x8x8x32xf32>, vector<2x8x8x32xf32>, vector<2x8x8x32xf32>, vector<2x8x8x32xf32>, vector<2x8x8x32xf32>, vector<2x8x8x32xf32> -> vector<2x8x8x288xf32>
    %24 = vector.shape_cast %23 : vector<2x8x8x288xf32> to vector<128x288xf32>
    %c0_10 = arith.constant 0 : index
    %c0_11 = arith.constant 0 : index
    %25 = vector.load %arg4[%c0_10, %c0_11] : memref<288x32xf32, #tpu.memory_space<vmem>>, vector<288x32xf32>
    %cst_12 = arith.constant dense<0.000000e+00> : vector<128x32xf32>
    %26 = tpu.matmul %24, %25, %cst_12 {dimension_numbers = #tpu.dot_dimension_numbers<[1], [0], [0], [1], [0, 0, 1, 1], [], []>} : vector<128x288xf32>, vector<288x32xf32>, vector<128x32xf32> -> vector<128x32xf32>
    %c0_13 = arith.constant 0 : index
    %c0_14 = arith.constant 0 : index
    %27 = vector.load %arg5[%c0_13, %c0_14] : memref<1x32xf32, #tpu.memory_space<vmem>>, vector<1x32xf32>
    %28 = vector.broadcast %27 : vector<1x32xf32> to vector<128x32xf32>
    %29 = arith.addf %26, %28 : vector<128x32xf32>
    %cst_15 = arith.constant 0.000000e+00 : f32
    %30 = vector.broadcast %cst_15 : f32 to vector<128x32xf32>
    %31 = arith.maximumf %29, %30 : vector<128x32xf32>
    %c0_16 = arith.constant 0 : index
    %c0_17 = arith.constant 0 : index
    %32 = vector.load %arg6[%c0_16, %c0_17] : memref<32x128xf32, #tpu.memory_space<vmem>>, vector<32x128xf32>
    %cst_18 = arith.constant dense<0.000000e+00> : vector<128x128xf32>
    %33 = tpu.matmul %31, %32, %cst_18 {dimension_numbers = #tpu.dot_dimension_numbers<[1], [0], [0], [1], [0, 0, 1, 1], [], []>} : vector<128x32xf32>, vector<32x128xf32>, vector<128x128xf32> -> vector<128x128xf32>
    %c0_19 = arith.constant 0 : index
    %c0_20 = arith.constant 0 : index
    %34 = vector.load %arg7[%c0_19, %c0_20] : memref<1x128xf32, #tpu.memory_space<vmem>>, vector<1x128xf32>
    %35 = vector.broadcast %34 : vector<1x128xf32> to vector<128x128xf32>
    %36 = arith.addf %33, %35 : vector<128x128xf32>
    %37 = arith.addf %36, %1 : vector<128x128xf32>
    %cst_21 = arith.constant 0.000000e+00 : f32
    %38 = vector.broadcast %cst_21 : f32 to vector<128x128xf32>
    %39 = arith.maximumf %37, %38 : vector<128x128xf32>
    %40 = vector.shape_cast %39 : vector<128x128xf32> to vector<2x8x8x128xf32>
    %c0_22 = arith.constant 0 : index
    %c0_23 = arith.constant 0 : index
    %c0_24 = arith.constant 0 : index
    %c0_25 = arith.constant 0 : index
    %41 = vector.load %arg8[%c0_22, %c0_23, %c0_24, %c0_25] : memref<2x8x8x128xf32, #tpu.memory_space<vmem>>, vector<2x8x8x128xf32>
    tpu.vector_store %arg8[%c0_22, %c0_23, %c0_24, %c0_25], %40 {strides = array<i32>} : memref<2x8x8x128xf32, #tpu.memory_space<vmem>>, vector<2x8x8x128xf32>,
    return
  }
  func.func @transform_0(%arg0: i32) -> (i32, i32, i32, i32) {
    %c0_i32 = arith.constant 0 : i32
    %c0_i32_0 = arith.constant 0 : i32
    %c0_i32_1 = arith.constant 0 : i32
    %c0_i32_2 = arith.constant 0 : i32
    return %arg0, %c0_i32, %c0_i32_0, %c0_i32_1 : i32, i32, i32, i32
  }
  func.func @transform_1(%arg0: i32) -> (i32, i32) {
    %c0_i32 = arith.constant 0 : i32
    %c0_i32_0 = arith.constant 0 : i32
    %c0_i32_1 = arith.constant 0 : i32
    return %c0_i32, %c0_i32_0 : i32, i32
  }
  func.func @transform_2(%arg0: i32) -> (i32, i32) {
    %c0_i32 = arith.constant 0 : i32
    %c0_i32_0 = arith.constant 0 : i32
    %c0_i32_1 = arith.constant 0 : i32
    return %c0_i32, %c0_i32_0 : i32, i32
  }
  func.func @transform_3(%arg0: i32) -> (i32, i32) {
    %c0_i32 = arith.constant 0 : i32
    %c0_i32_0 = arith.constant 0 : i32
    %c0_i32_1 = arith.constant 0 : i32
    return %c0_i32, %c0_i32_0 : i32, i32
  }
  func.func @transform_4(%arg0: i32) -> (i32, i32) {
    %c0_i32 = arith.constant 0 : i32
    %c0_i32_0 = arith.constant 0 : i32
    %c0_i32_1 = arith.constant 0 : i32
    return %c0_i32, %c0_i32_0 : i32, i32
  }
  func.func @transform_5(%arg0: i32) -> (i32, i32) {
    %c0_i32 = arith.constant 0 : i32
    %c0_i32_0 = arith.constant 0 : i32
    %c0_i32_1 = arith.constant 0 : i32
    return %c0_i32, %c0_i32_0 : i32, i32
  }
  func.func @transform_6(%arg0: i32) -> (i32, i32) {
    %c0_i32 = arith.constant 0 : i32
    %c0_i32_0 = arith.constant 0 : i32
    %c0_i32_1 = arith.constant 0 : i32
    return %c0_i32, %c0_i32_0 : i32, i32
  }
  func.func @transform_7(%arg0: i32) -> (i32, i32, i32, i32) {
    %c0_i32 = arith.constant 0 : i32
    %c0_i32_0 = arith.constant 0 : i32
    %c0_i32_1 = arith.constant 0 : i32
    %c0_i32_2 = arith.constant 0 : i32
    return %arg0, %c0_i32, %c0_i32_0, %c0_i32_1 : i32, i32, i32, i32
  }
}

</mosaic_0001>

<llo_original>
// kernel: tpu_custom_call.1
$region0: #{tpu_custom_call.1}
  #allocation0 [shape = 'u32[]', space=smem, size = 0x4, offset = 0x4, fixed_abs, tag = 'smem constant byte address 0x4 - core index']
  #allocation1 [shape = 'u32[144,128]{1,0:T(1,128)}', space=vmem, size = 0x12000, scoped, tag = 'internal scratch']
  %s0 = inlined_call_operand.vmem [shape: f32[2,8,8,128], index: 0, kind: input, shape index: {}]
  %s1 = inlined_call_operand.vmem [shape: f32[128,32], index: 1, kind: input, shape index: {}]
  %s2 = inlined_call_operand.vmem [shape: f32[1,32], index: 2, kind: input, shape index: {}]
  %s3 = inlined_call_operand.vmem [shape: f32[288,32], index: 3, kind: input, shape index: {}]
  %s4 = inlined_call_operand.vmem [shape: f32[1,32], index: 4, kind: input, shape index: {}]
  %s5 = inlined_call_operand.vmem [shape: f32[32,128], index: 5, kind: input, shape index: {}]
  %s6 = inlined_call_operand.vmem [shape: f32[1,128], index: 6, kind: input, shape index: {}]
  %s7 = inlined_call_operand.hbm [shape: f32[2,8,8,128], index: 7, kind: output, shape index: {}]
  %s8 = sld [smem:[#allocation0]]
  $region38: #{tpu_custom_call.1} parent=0
    _
  %s10 = ssub.s32 1, %s8
  %s11 = scalar_select 0, %s10, %s8
  $region1: #{tpu_custom_call.1} parent=0
    #allocation2 [shape = 'u8[65536]{0}', space=vmem, size = 0x10000, scoped, tag = 'output window, operand 0, single buffered']
    #allocation3 [shape = 's32[1]{0}', space=sflag, size = 0x4, scoped, tag = 'scoped memory for tpu_custom_call.1']
    %12 = vsyncpa [#allocation3], 0
    // Predicated region
    $region2: #{tpu_custom_call.1} parent=1 // pred_check
      _
    $region3: #{tpu_custom_call.1} parent=1 // pred_check_branch
      %14 = sbr.rel (0) target = $region5
    $region4: #{tpu_custom_call.1} parent=1 // pred_region
      _
    $region5: #{tpu_custom_call.1} parent=1 // pred_fallthru
      _
    // Predicated region
    $region6: #{tpu_custom_call.1} parent=1 // pred_check
      _
    $region7: #{tpu_custom_call.1} parent=1 // pred_check_branch
      %16 = sbr.rel (0) target = $region9
    $region8: #{tpu_custom_call.1} parent=1 // pred_region
      _
    $region9: #{tpu_custom_call.1} parent=1 // pred_fallthru
      _
    // Predicated region
    $region10: #{tpu_custom_call.1} parent=1 // pred_check
      _
    $region11: #{tpu_custom_call.1} parent=1 // pred_check_branch
      %18 = sbr.rel (0) target = $region13
    $region12: #{tpu_custom_call.1} parent=1 // pred_region
      _
    $region13: #{tpu_custom_call.1} parent=1 // pred_fallthru
      _
    // Predicated region
    $region14: #{tpu_custom_call.1} parent=1 // pred_check
      _
    $region15: #{tpu_custom_call.1} parent=1 // pred_check_branch
      %20 = sbr.rel (0) target = $region17
    $region16: #{tpu_custom_call.1} parent=1 // pred_region
      _
    $region17: #{tpu_custom_call.1} parent=1 // pred_fallthru
      _
    // Predicated region
    $region18: #{tpu_custom_call.1} parent=1 // pred_check
      _
    $region19: #{tpu_custom_call.1} parent=1 // pred_check_branch
      %22 = sbr.rel (0) target = $region21
    $region20: #{tpu_custom_call.1} parent=1 // pred_region
      _
    $region21: #{tpu_custom_call.1} parent=1 // pred_fallthru
      _
    // Predicated region
    $region22: #{tpu_custom_call.1} parent=1 // pred_check
      _
    $region23: #{tpu_custom_call.1} parent=1 // pred_check_branch
      %24 = sbr.rel (0) target = $region25
    $region24: #{tpu_custom_call.1} parent=1 // pred_region
      _
    $region25: #{tpu_custom_call.1} parent=1 // pred_fallthru
      _
    // Predicated region
    $region26: #{tpu_custom_call.1} parent=1 // pred_check
      _
    $region27: #{tpu_custom_call.1} parent=1 // pred_check_branch
      %26 = sbr.rel (0) target = $region29
    $region28: #{tpu_custom_call.1} parent=1 // pred_region
      _
    $region29: #{tpu_custom_call.1} parent=1 // pred_fallthru
      _
    %v27 = vld [vmem:[%s0] sm:$0xff]
    %v28 = vld [vmem:[%s0 + $0x8] sm:$0xff]
    %v29 = vld [vmem:[%s0 + $0x10] sm:$0xff]
    %v30 = vld [vmem:[%s0 + $0x18] sm:$0xff]
    %v31 = vld [vmem:[%s0 + $0x20] sm:$0xff]
    %v32 = vld [vmem:[%s0 + $0x28] sm:$0xff]
    %v33 = vld [vmem:[%s0 + $0x30] sm:$0xff]
    %v34 = vld [vmem:[%s0 + $0x38] sm:$0xff]
    %v35 = vld [vmem:[%s0 + $0x40] sm:$0xff]
    %v36 = vld [vmem:[%s0 + $0x48] sm:$0xff]
    %v37 = vld [vmem:[%s0 + $0x50] sm:$0xff]
    %v38 = vld [vmem:[%s0 + $0x58] sm:$0xff]
    %v39 = vld [vmem:[%s0 + $0x60] sm:$0xff]
    %v40 = vld [vmem:[%s0 + $0x68] sm:$0xff]
    %v41 = vld [vmem:[%s0 + $0x70] sm:$0xff]
    %v42 = vld [vmem:[%s0 + $0x78] sm:$0xff]
    %v43 = vld [vmem:[%s1] sm:$0xff]
    %v44 = vld [vmem:[%s1 + $0x8] sm:$0xff]
    %v45 = vld [vmem:[%s1 + $0x10] sm:$0xff]
    %v46 = vld [vmem:[%s1 + $0x18] sm:$0xff]
    %v47 = vld [vmem:[%s1 + $0x20] sm:$0xff]
    %v48 = vld [vmem:[%s1 + $0x28] sm:$0xff]
    %v49 = vld [vmem:[%s1 + $0x30] sm:$0xff]
    %v50 = vld [vmem:[%s1 + $0x38] sm:$0xff]
    %v51 = vld [vmem:[%s1 + $0x40] sm:$0xff]
    %v52 = vld [vmem:[%s1 + $0x48] sm:$0xff]
    %v53 = vld [vmem:[%s1 + $0x50] sm:$0xff]
    %v54 = vld [vmem:[%s1 + $0x58] sm:$0xff]
    %v55 = vld [vmem:[%s1 + $0x60] sm:$0xff]
    %v56 = vld [vmem:[%s1 + $0x68] sm:$0xff]
    %v57 = vld [vmem:[%s1 + $0x70] sm:$0xff]
    %v58 = vld [vmem:[%s1 + $0x78] sm:$0xff]
    %v59 = vld [vmem:[%s2] sm:$0x1]
    %v61 = vlaneseq
    %v62 = vshrl.u32 %v61, 7
    %v63 = vsub.s32 0, %v62
    %v64 = vrot.slane %v59, %v63
    %66 = vmatprep.subr.mxu0 0.0
    %67 = vmatpush1.msra.mxu0 %v58
    %68 = vmatprep.subr.mxu0 0.0
    %69 = vmatpush1.msra.mxu0 %v57
    %70 = vmatprep.subr.mxu0 0.0
    %71 = vmatpush1.msra.mxu0 %v56
    %72 = vmatprep.subr.mxu0 0.0
    %73 = vmatpush1.msra.mxu0 %v55
    %74 = vmatprep.subr.mxu0 0.0
    %75 = vmatpush1.msra.mxu0 %v54
    %76 = vmatprep.subr.mxu0 0.0
    %77 = vmatpush1.msra.mxu0 %v53
    %78 = vmatprep.subr.mxu0 0.0
    %79 = vmatpush1.msra.mxu0 %v52
    %80 = vmatprep.subr.mxu0 0.0
    %81 = vmatpush1.msra.mxu0 %v51
    %82 = vmatprep.subr.mxu0 0.0
    %83 = vmatpush1.msra.mxu0 %v50
    %84 = vmatprep.subr.mxu0 0.0
    %85 = vmatpush1.msra.mxu0 %v49
    %86 = vmatprep.subr.mxu0 0.0
    %87 = vmatpush1.msra.mxu0 %v48
    %88 = vmatprep.subr.mxu0 0.0
    %89 = vmatpush1.msra.mxu0 %v47
    %90 = vmatprep.subr.mxu0 0.0
    %91 = vmatpush1.msra.mxu0 %v46
    %92 = vmatprep.subr.mxu0 0.0
    %93 = vmatpush1.msra.mxu0 %v45
    %94 = vmatprep.subr.mxu0 0.0
    %95 = vmatpush1.msra.mxu0 %v44
    %96 = vmatprep.subr.mxu0 0.0
    %97 = vmatpush1.msra.mxu0 %v43
    %98 = vmatprep.subr.mxu0 0.0
    %99 = vmatpush2.msra.mxu0 0.0
    %100 = vmatprep.subr.mxu0 0.0
    %101 = vmatpush2.msra.mxu0 0.0
    %102 = vmatprep.subr.mxu0 0.0
    %103 = vmatpush2.msra.mxu0 0.0
    %104 = vmatprep.subr.mxu0 0.0
    %105 = vmatpush2.msra.mxu0 0.0
    %106 = vmatprep.subr.mxu0 0.0
    %107 = vmatpush2.msra.mxu0 0.0
    %108 = vmatprep.subr.mxu0 0.0
    %109 = vmatpush2.msra.mxu0 0.0
    %110 = vmatprep.subr.mxu0 0.0
    %111 = vmatpush2.msra.mxu0 0.0
    %112 = vmatprep.subr.mxu0 0.0
    %113 = vmatpush2.msra.mxu0 0.0
    %114 = vmatprep.subr.mxu0 0.0
    %115 = vmatpush2.msra.mxu0 0.0
    %116 = vmatprep.subr.mxu0 0.0
    %117 = vmatpush2.msra.mxu0 0.0
    %118 = vmatprep.subr.mxu0 0.0
    %119 = vmatpush2.msra.mxu0 0.0
    %120 = vmatprep.subr.mxu0 0.0
    %121 = vmatpush2.msra.mxu0 0.0
    %122 = vmatprep.subr.mxu0 0.0
    %123 = vmatpush2.msra.mxu0 0.0
    %124 = vmatprep.subr.mxu0 0.0
    %125 = vmatpush2.msra.mxu0 0.0
    %126 = vmatprep.subr.mxu0 0.0
    %127 = vmatpush2.msra.mxu0 0.0
    %128 = vmatprep.subr.mxu0 0.0
    %129 = vmatpush2.msra.mxu0 0.0
    %130 = vmatprep.mubr.f32.mxu0 0.0
    %131 = vmatmul.mubr.f32.gmra.mxu0 %v27
    %v132 = vpop.f32.mrf.mxu0
    %v133 = vadd.f32 %v64, %v132
    %v134 = vpop.f32.mrf.mxu0
    %135 = vmatprep.mubr.f32.mxu0 0.0
    %136 = vmatmul.mubr.f32.gmra.mxu0 %v28
    %v137 = vpop.f32.mrf.mxu0
    %v138 = vadd.f32 %v64, %v137
    %v139 = vpop.f32.mrf.mxu0
    %140 = vmatprep.mubr.f32.mxu0 0.0
    %141 = vmatmul.mubr.f32.gmra.mxu0 %v29
    %v142 = vpop.f32.mrf.mxu0
    %v143 = vadd.f32 %v64, %v142
    %v144 = vpop.f32.mrf.mxu0
    %145 = vmatprep.mubr.f32.mxu0 0.0
    %146 = vmatmul.mubr.f32.gmra.mxu0 %v30
    %v147 = vpop.f32.mrf.mxu0
    %v148 = vadd.f32 %v64, %v147
    %v149 = vpop.f32.mrf.mxu0
    %150 = vmatprep.mubr.f32.mxu0 0.0
    %151 = vmatmul.mubr.f32.gmra.mxu0 %v31
    %v152 = vpop.f32.mrf.mxu0
    %v153 = vadd.f32 %v64, %v152
    %v154 = vpop.f32.mrf.mxu0
    %155 = vmatprep.mubr.f32.mxu0 0.0
    %156 = vmatmul.mubr.f32.gmra.mxu0 %v32
    %v157 = vpop.f32.mrf.mxu0
    %v158 = vadd.f32 %v64, %v157
    %v159 = vpop.f32.mrf.mxu0
    %160 = vmatprep.mubr.f32.mxu0 0.0
    %161 = vmatmul.mubr.f32.gmra.mxu0 %v33
    %v162 = vpop.f32.mrf.mxu0
    %v163 = vadd.f32 %v64, %v162
    %v164 = vpop.f32.mrf.mxu0
    %165 = vmatprep.mubr.f32.mxu0 0.0
    %166 = vmatmul.mubr.f32.gmra.mxu0 %v34
    %v167 = vpop.f32.mrf.mxu0
    %v168 = vadd.f32 %v64, %v167
    %v169 = vpop.f32.mrf.mxu0
    %170 = vmatprep.mubr.f32.mxu0 0.0
    %171 = vmatmul.mubr.f32.gmra.mxu0 %v35
    %v172 = vpop.f32.mrf.mxu0
    %v173 = vadd.f32 %v64, %v172
    %v174 = vpop.f32.mrf.mxu0
    %175 = vmatprep.mubr.f32.mxu0 0.0
    %176 = vmatmul.mubr.f32.gmra.mxu0 %v36
    %v177 = vpop.f32.mrf.mxu0
    %v178 = vadd.f32 %v64, %v177
    %v179 = vpop.f32.mrf.mxu0
    %180 = vmatprep.mubr.f32.mxu0 0.0
    %181 = vmatmul.mubr.f32.gmra.mxu0 %v37
    %v182 = vpop.f32.mrf.mxu0
    %v183 = vadd.f32 %v64, %v182
    %v184 = vpop.f32.mrf.mxu0
    %185 = vmatprep.mubr.f32.mxu0 0.0
    %186 = vmatmul.mubr.f32.gmra.mxu0 %v38
    %v187 = vpop.f32.mrf.mxu0
    %v188 = vadd.f32 %v64, %v187
    %v189 = vpop.f32.mrf.mxu0
    %190 = vmatprep.mubr.f32.mxu0 0.0
    %191 = vmatmul.mubr.f32.gmra.mxu0 %v39
    %v192 = vpop.f32.mrf.mxu0
    %v193 = vadd.f32 %v64, %v192
    %v194 = vpop.f32.mrf.mxu0
    %195 = vmatprep.mubr.f32.mxu0 0.0
    %196 = vmatmul.mubr.f32.gmra.mxu0 %v40
    %v197 = vpop.f32.mrf.mxu0
    %v198 = vadd.f32 %v64, %v197
    %v199 = vpop.f32.mrf.mxu0
    %200 = vmatprep.mubr.f32.mxu0 0.0
    %201 = vmatmul.mubr.f32.gmra.mxu0 %v41
    %v202 = vpop.f32.mrf.mxu0
    %v203 = vadd.f32 %v64, %v202
    %v204 = vpop.f32.mrf.mxu0
    %205 = vmatprep.mubr.f32.mxu0 0.0
    %206 = vmatmul.mubr.f32.gmra.mxu0 %v42
    %v207 = vpop.f32.mrf.mxu0
    %v208 = vadd.f32 %v64, %v207
    %v209 = vpop.f32.mrf.mxu0
    %210 = vdwg.mxu0
    %v211 = vmax.f32 %v133, 0.0
    %v212 = vmax.f32 %v138, 0.0
    %v213 = vmax.f32 %v143, 0.0
    %v214 = vmax.f32 %v148, 0.0
    %v215 = vmax.f32 %v153, 0.0
    %v216 = vmax.f32 %v158, 0.0
    %v217 = vmax.f32 %v163, 0.0
    %v218 = vmax.f32 %v168, 0.0
    %v219 = vmax.f32 %v173, 0.0
    %v220 = vmax.f32 %v178, 0.0
    %v221 = vmax.f32 %v183, 0.0
    %v222 = vmax.f32 %v188, 0.0
    %v223 = vmax.f32 %v193, 0.0
    %v224 = vmax.f32 %v198, 0.0
    %v225 = vmax.f32 %v203, 0.0
    %v226 = vmax.f32 %v208, 0.0
    %v244 = vrot.slane 0.0, 7
    %v245 = vrot.slane %v211, 7
    %v246 = vrot.slane %v212, 7
    %v247 = vrot.slane %v213, 7
    %v248 = vrot.slane %v214, 7
    %v249 = vrot.slane %v215, 7
    %v250 = vrot.slane %v216, 7
    %v251 = vrot.slane %v217, 7
    %v252 = vrot.slane %v218, 7
    %v253 = vrot.slane %v219, 7
    %v254 = vrot.slane %v220, 7
    %v255 = vrot.slane %v221, 7
    %v256 = vrot.slane %v222, 7
    %v257 = vrot.slane %v223, 7
    %v258 = vrot.slane %v224, 7
    %v259 = vrot.slane %v225, 7
    %v260 = vrot.slane %v226, 7
    %vm278 = vcmask 1040384
    %v279 = vsel %vm278, 0.0, %v244
    %v280 = vsel %vm278, 0.0, %v245
    %v281 = vsel %vm278, 0.0, %v246
    %v282 = vsel %vm278, 0.0, %v247
    %v283 = vsel %vm278, 0.0, %v248
    %v284 = vsel %vm278, 0.0, %v249
    %v285 = vsel %vm278, 0.0, %v250
    %v286 = vsel %vm278, 0.0, %v251
    %v287 = vsel %vm278, 0.0, %v252
    %v288 = vsel %vm278, 0.0, %v253
    %v289 = vsel %vm278, 0.0, %v254
    %v290 = vsel %vm278, 0.0, %v255
    %v291 = vsel %vm278, 0.0, %v256
    %v292 = vsel %vm278, 0.0, %v257
    %v293 = vsel %vm278, 0.0, %v258
    %v294 = vsel %vm278, 0.0, %v259
    %v295 = vsel %vm278, 0.0, %v260
    %v296 = vsel %vm278, %v244, 0.0
    %v297 = vsel %vm278, %v245, 0.0
    %v298 = vsel %vm278, %v246, 0.0
    %v299 = vsel %vm278, %v247, 0.0
    %v300 = vsel %vm278, %v248, 0.0
    %v301 = vsel %vm278, %v249, 0.0
    %v302 = vsel %vm278, %v250, 0.0
    %v303 = vsel %vm278, %v251, 0.0
    %v304 = vsel %vm278, %v252, 0.0
    %v305 = vsel %vm278, %v253, 0.0
    %v306 = vsel %vm278, %v254, 0.0
    %v307 = vsel %vm278, %v255, 0.0
    %v308 = vsel %vm278, %v256, 0.0
    %v309 = vsel %vm278, %v257, 0.0
    %v310 = vsel %vm278, %v258, 0.0
    %v311 = vsel %vm278, %v259, 0.0
    %v312 = vsel %vm278, %v260, 0.0
    %vm343 = vcmask 1046528
    %v344 = vrot.slane %v279, 1
    %v345 = vrot.slane %v296, 1
    %v346 = vsel %vm343, %v344, %v345
    %v347 = vrot.slane %v280, 1
    %v348 = vrot.slane %v297, 1
    %v349 = vsel %vm343, %v347, %v348
    %v350 = vrot.slane %v281, 1
    %v351 = vrot.slane %v298, 1
    %v352 = vsel %vm343, %v350, %v351
    %v353 = vrot.slane %v282, 1
    %v354 = vrot.slane %v299, 1
    %v355 = vsel %vm343, %v353, %v354
    %v356 = vrot.slane %v283, 1
    %v357 = vrot.slane %v300, 1
    %v358 = vsel %vm343, %v356, %v357
    %v359 = vrot.slane %v284, 1
    %v360 = vrot.slane %v301, 1
    %v361 = vsel %vm343, %v359, %v360
    %v362 = vrot.slane %v285, 1
    %v363 = vrot.slane %v302, 1
    %v364 = vsel %vm343, %v362, %v363
    %v365 = vrot.slane %v286, 1
    %v366 = vrot.slane %v303, 1
    %v367 = vsel %vm343, %v365, %v366
    %v368 = vrot.slane %v288, 1
    %v369 = vrot.slane %v305, 1
    %v370 = vsel %vm343, %v368, %v369
    %v371 = vrot.slane %v289, 1
    %v372 = vrot.slane %v306, 1
    %v373 = vsel %vm343, %v371, %v372
    %v374 = vrot.slane %v290, 1
    %v375 = vrot.slane %v307, 1
    %v376 = vsel %vm343, %v374, %v375
    %v377 = vrot.slane %v291, 1
    %v378 = vrot.slane %v308, 1
    %v379 = vsel %vm343, %v377, %v378
    %v380 = vrot.slane %v292, 1
    %v381 = vrot.slane %v309, 1
    %v382 = vsel %vm343, %v380, %v381
    %v383 = vrot.slane %v293, 1
    %v384 = vrot.slane %v310, 1
    %v385 = vsel %vm343, %v383, %v384
    %v386 = vrot.slane %v294, 1
    %v387 = vrot.slane %v311, 1
    %v388 = vsel %vm343, %v386, %v387
    %389 = vrot.lane.b32.xlu0 %v346, 32
    %v390 = vpop.permute.xlu0 %389
    %391 = vrot.lane.b32.xlu0 %v349, 32
    %v392 = vpop.permute.xlu0 %391
    %393 = vrot.lane.b32.xlu0 %v352, 32
    %v394 = vpop.permute.xlu0 %393
    %395 = vrot.lane.b32.xlu0 %v355, 32
    %v396 = vpop.permute.xlu0 %395
    %397 = vrot.lane.b32.xlu0 %v358, 32
    %v398 = vpop.permute.xlu0 %397
    %399 = vrot.lane.b32.xlu0 %v361, 32
    %v400 = vpop.permute.xlu0 %399
    %401 = vrot.lane.b32.xlu0 %v364, 32
    %v402 = vpop.permute.xlu0 %401
    %403 = vrot.lane.b32.xlu0 %v367, 32
    %v404 = vpop.permute.xlu0 %403
    %405 = vrot.lane.b32.xlu0 %v370, 32
    %v406 = vpop.permute.xlu0 %405
    %407 = vrot.lane.b32.xlu0 %v373, 32
    %v408 = vpop.permute.xlu0 %407
    %409 = vrot.lane.b32.xlu0 %v376, 32
    %v410 = vpop.permute.xlu0 %409
    %411 = vrot.lane.b32.xlu0 %v379, 32
    %v412 = vpop.permute.xlu0 %411
    %413 = vrot.lane.b32.xlu0 %v382, 32
    %v414 = vpop.permute.xlu0 %413
    %415 = vrot.lane.b32.xlu0 %v385, 32
    %v416 = vpop.permute.xlu0 %415
    %417 = vrot.lane.b32.xlu0 %v388, 32
    %v418 = vpop.permute.xlu0 %417
    %vm434 = vcmask 1045504
    %v435 = vrot.slane %v279, 2
    %v436 = vrot.slane %v296, 2
    %v437 = vsel %vm434, %v435, %v436
    %v438 = vrot.slane %v280, 2
    %v439 = vrot.slane %v297, 2
    %v440 = vsel %vm434, %v438, %v439
    %v441 = vrot.slane %v281, 2
    %v442 = vrot.slane %v298, 2
    %v443 = vsel %vm434, %v441, %v442
    %v444 = vrot.slane %v282, 2
    %v445 = vrot.slane %v299, 2
    %v446 = vsel %vm434, %v444, %v445
    %v447 = vrot.slane %v283, 2
    %v448 = vrot.slane %v300, 2
    %v449 = vsel %vm434, %v447, %v448
    %v450 = vrot.slane %v284, 2
    %v451 = vrot.slane %v301, 2
    %v452 = vsel %vm434, %v450, %v451
    %v453 = vrot.slane %v285, 2
    %v454 = vrot.slane %v302, 2
    %v455 = vsel %vm434, %v453, %v454
    %v456 = vrot.slane %v286, 2
    %v457 = vrot.slane %v303, 2
    %v458 = vsel %vm434, %v456, %v457
    %v459 = vrot.slane %v288, 2
    %v460 = vrot.slane %v305, 2
    %v461 = vsel %vm434, %v459, %v460
    %v462 = vrot.slane %v289, 2
    %v463 = vrot.slane %v306, 2
    %v464 = vsel %vm434, %v462, %v463
    %v465 = vrot.slane %v290, 2
    %v466 = vrot.slane %v307, 2
    %v467 = vsel %vm434, %v465, %v466
    %v468 = vrot.slane %v291, 2
    %v469 = vrot.slane %v308, 2
    %v470 = vsel %vm434, %v468, %v469
    %v471 = vrot.slane %v292, 2
    %v472 = vrot.slane %v309, 2
    %v473 = vsel %vm434, %v471, %v472
    %v474 = vrot.slane %v293, 2
    %v475 = vrot.slane %v310, 2
    %v476 = vsel %vm434, %v474, %v475
    %v477 = vrot.slane %v294, 2
    %v478 = vrot.slane %v311, 2
    %v479 = vsel %vm434, %v477, %v478
    %480 = vrot.lane.b32.xlu0 %v437, 64
    %v481 = vpop.permute.xlu0 %480
    %482 = vrot.lane.b32.xlu0 %v440, 64
    %v483 = vpop.permute.xlu0 %482
    %484 = vrot.lane.b32.xlu0 %v443, 64
    %v485 = vpop.permute.xlu0 %484
    %486 = vrot.lane.b32.xlu0 %v446, 64
    %v487 = vpop.permute.xlu0 %486
    %488 = vrot.lane.b32.xlu0 %v449, 64
    %v489 = vpop.permute.xlu0 %488
    %490 = vrot.lane.b32.xlu0 %v452, 64
    %v491 = vpop.permute.xlu0 %490
    %492 = vrot.lane.b32.xlu0 %v455, 64
    %v493 = vpop.permute.xlu0 %492
    %494 = vrot.lane.b32.xlu0 %v458, 64
    %v495 = vpop.permute.xlu0 %494
    %496 = vrot.lane.b32.xlu0 %v461, 64
    %v497 = vpop.permute.xlu0 %496
    %498 = vrot.lane.b32.xlu0 %v464, 64
    %v499 = vpop.permute.xlu0 %498
    %500 = vrot.lane.b32.xlu0 %v467, 64
    %v501 = vpop.permute.xlu0 %500
    %502 = vrot.lane.b32.xlu0 %v470, 64
    %v503 = vpop.permute.xlu0 %502
    %504 = vrot.lane.b32.xlu0 %v473, 64
    %v505 = vpop.permute.xlu0 %504
    %506 = vrot.lane.b32.xlu0 %v476, 64
    %v507 = vpop.permute.xlu0 %506
    %508 = vrot.lane.b32.xlu0 %v479, 64
    %v509 = vpop.permute.xlu0 %508
    %527 = vrot.lane.b32.xlu0 %v280, 96
    %v528 = vpop.permute.xlu0 %527
    %529 = vrot.lane.b32.xlu0 %v281, 96
    %v530 = vpop.permute.xlu0 %529
    %531 = vrot.lane.b32.xlu0 %v282, 96
    %v532 = vpop.permute.xlu0 %531
    %533 = vrot.lane.b32.xlu0 %v283, 96
    %v534 = vpop.permute.xlu0 %533
    %535 = vrot.lane.b32.xlu0 %v284, 96
    %v536 = vpop.permute.xlu0 %535
    %537 = vrot.lane.b32.xlu0 %v285, 96
    %v538 = vpop.permute.xlu0 %537
    %539 = vrot.lane.b32.xlu0 %v286, 96
    %v540 = vpop.permute.xlu0 %539
    %541 = vrot.lane.b32.xlu0 %v287, 96
    %v542 = vpop.permute.xlu0 %541
    %543 = vrot.lane.b32.xlu0 %v288, 96
    %v544 = vpop.permute.xlu0 %543
    %545 = vrot.lane.b32.xlu0 %v289, 96
    %v546 = vpop.permute.xlu0 %545
    %547 = vrot.lane.b32.xlu0 %v290, 96
    %v548 = vpop.permute.xlu0 %547
    %549 = vrot.lane.b32.xlu0 %v291, 96
    %v550 = vpop.permute.xlu0 %549
    %551 = vrot.lane.b32.xlu0 %v292, 96
    %v552 = vpop.permute.xlu0 %551
    %553 = vrot.lane.b32.xlu0 %v293, 96
    %v554 = vpop.permute.xlu0 %553
    %555 = vrot.lane.b32.xlu0 %v294, 96
    %v556 = vpop.permute.xlu0 %555
    %557 = vrot.lane.b32.xlu0 %v295, 96
    %v558 = vpop.permute.xlu0 %557
    %v577 = vrot.slane %v287, 1
    %v578 = vrot.slane %v304, 1
    %v579 = vsel %vm343, %v577, %v578
    %v580 = vrot.slane %v295, 1
    %v581 = vrot.slane %v312, 1
    %v582 = vsel %vm343, %v580, %v581
    %v599 = vrot.slane %v287, 2
    %v600 = vrot.slane %v304, 2
    %v601 = vsel %vm434, %v599, %v600
    %v602 = vrot.slane %v295, 2
    %v603 = vrot.slane %v312, 2
    %v604 = vsel %vm434, %v602, %v603
    %605 = vrot.lane.b32.xlu0 %v440, 32
    %v606 = vpop.permute.xlu0 %605
    %607 = vrot.lane.b32.xlu0 %v443, 32
    %v608 = vpop.permute.xlu0 %607
    %609 = vrot.lane.b32.xlu0 %v446, 32
    %v610 = vpop.permute.xlu0 %609
    %611 = vrot.lane.b32.xlu0 %v449, 32
    %v612 = vpop.permute.xlu0 %611
    %613 = vrot.lane.b32.xlu0 %v452, 32
    %v614 = vpop.permute.xlu0 %613
    %615 = vrot.lane.b32.xlu0 %v455, 32
    %v616 = vpop.permute.xlu0 %615
    %617 = vrot.lane.b32.xlu0 %v458, 32
    %v618 = vpop.permute.xlu0 %617
    %619 = vrot.lane.b32.xlu0 %v601, 32
    %v620 = vpop.permute.xlu0 %619
    %621 = vrot.lane.b32.xlu0 %v461, 32
    %v622 = vpop.permute.xlu0 %621
    %623 = vrot.lane.b32.xlu0 %v464, 32
    %v624 = vpop.permute.xlu0 %623
    %625 = vrot.lane.b32.xlu0 %v467, 32
    %v626 = vpop.permute.xlu0 %625
    %627 = vrot.lane.b32.xlu0 %v470, 32
    %v628 = vpop.permute.xlu0 %627
    %629 = vrot.lane.b32.xlu0 %v473, 32
    %v630 = vpop.permute.xlu0 %629
    %631 = vrot.lane.b32.xlu0 %v476, 32
    %v632 = vpop.permute.xlu0 %631
    %633 = vrot.lane.b32.xlu0 %v479, 32
    %v634 = vpop.permute.xlu0 %633
    %635 = vrot.lane.b32.xlu0 %v604, 32
    %v636 = vpop.permute.xlu0 %635
    %653 = vrot.lane.b32.xlu0 %v281, 64
    %v654 = vpop.permute.xlu0 %653
    %655 = vrot.lane.b32.xlu0 %v282, 64
    %v656 = vpop.permute.xlu0 %655
    %657 = vrot.lane.b32.xlu0 %v283, 64
    %v658 = vpop.permute.xlu0 %657
    %659 = vrot.lane.b32.xlu0 %v284, 64
    %v660 = vpop.permute.xlu0 %659
    %661 = vrot.lane.b32.xlu0 %v285, 64
    %v662 = vpop.permute.xlu0 %661
    %663 = vrot.lane.b32.xlu0 %v286, 64
    %v664 = vpop.permute.xlu0 %663
    %665 = vrot.lane.b32.xlu0 %v287, 64
    %v666 = vpop.permute.xlu0 %665
    %667 = vrot.lane.b32.xlu0 %v279, 64
    %v668 = vpop.permute.xlu0 %667
    %669 = vrot.lane.b32.xlu0 %v289, 64
    %v670 = vpop.permute.xlu0 %669
    %671 = vrot.lane.b32.xlu0 %v290, 64
    %v672 = vpop.permute.xlu0 %671
    %673 = vrot.lane.b32.xlu0 %v291, 64
    %v674 = vpop.permute.xlu0 %673
    %675 = vrot.lane.b32.xlu0 %v292, 64
    %v676 = vpop.permute.xlu0 %675
    %677 = vrot.lane.b32.xlu0 %v293, 64
    %v678 = vpop.permute.xlu0 %677
    %679 = vrot.lane.b32.xlu0 %v294, 64
    %v680 = vpop.permute.xlu0 %679
    %681 = vrot.lane.b32.xlu0 %v295, 64
    %v682 = vpop.permute.xlu0 %681
    %698 = vrot.lane.b32.xlu0 %v352, 96
    %v699 = vpop.permute.xlu0 %698
    %700 = vrot.lane.b32.xlu0 %v355, 96
    %v701 = vpop.permute.xlu0 %700
    %702 = vrot.lane.b32.xlu0 %v358, 96
    %v703 = vpop.permute.xlu0 %702
    %704 = vrot.lane.b32.xlu0 %v361, 96
    %v705 = vpop.permute.xlu0 %704
    %706 = vrot.lane.b32.xlu0 %v364, 96
    %v707 = vpop.permute.xlu0 %706
    %708 = vrot.lane.b32.xlu0 %v367, 96
    %v709 = vpop.permute.xlu0 %708
    %710 = vrot.lane.b32.xlu0 %v579, 96
    %v711 = vpop.permute.xlu0 %710
    %712 = vrot.lane.b32.xlu0 %v346, 96
    %v713 = vpop.permute.xlu0 %712
    %714 = vrot.lane.b32.xlu0 %v373, 96
    %v715 = vpop.permute.xlu0 %714
    %716 = vrot.lane.b32.xlu0 %v376, 96
    %v717 = vpop.permute.xlu0 %716
    %718 = vrot.lane.b32.xlu0 %v379, 96
    %v719 = vpop.permute.xlu0 %718
    %720 = vrot.lane.b32.xlu0 %v382, 96
    %v721 = vpop.permute.xlu0 %720
    %722 = vrot.lane.b32.xlu0 %v385, 96
    %v723 = vpop.permute.xlu0 %722
    %724 = vrot.lane.b32.xlu0 %v388, 96
    %v725 = vpop.permute.xlu0 %724
    %726 = vrot.lane.b32.xlu0 %v582, 96
    %v727 = vpop.permute.xlu0 %726
    %vm743 = vcmask 261120
    %v744 = vsel %vm743, %v279, %v390
    %v745 = vsel %vm743, %v280, %v392
    %v746 = vsel %vm743, %v281, %v394
    %v747 = vsel %vm743, %v282, %v396
    %v748 = vsel %vm743, %v283, %v398
    %v749 = vsel %vm743, %v284, %v400
    %v750 = vsel %vm743, %v285, %v402
    %v751 = vsel %vm743, %v286, %v404
    %v752 = vsel %vm743, %v288, %v406
    %v753 = vsel %vm743, %v289, %v408
    %v754 = vsel %vm743, %v290, %v410
    %v755 = vsel %vm743, %v291, %v412
    %v756 = vsel %vm743, %v292, %v414
    %v757 = vsel %vm743, %v293, %v416
    %v758 = vsel %vm743, %v294, %v418
    %vm759 = vcmask 523264
    %v760 = vsel %vm759, %v744, %v481
    %v761 = vsel %vm759, %v745, %v483
    %v762 = vsel %vm759, %v746, %v485
    %v763 = vsel %vm759, %v747, %v487
    %v764 = vsel %vm759, %v748, %v489
    %v765 = vsel %vm759, %v749, %v491
    %v766 = vsel %vm759, %v750, %v493
    %v767 = vsel %vm759, %v751, %v495
    %v768 = vsel %vm759, %v752, %v497
    %v769 = vsel %vm759, %v753, %v499
    %v770 = vsel %vm759, %v754, %v501
    %v771 = vsel %vm759, %v755, %v503
    %v772 = vsel %vm759, %v756, %v505
    %v773 = vsel %vm759, %v757, %v507
    %v774 = vsel %vm759, %v758, %v509
    %vm775 = vcmask 785408
    %v776 = vsel %vm775, %v760, %v528
    %v777 = vsel %vm775, %v761, %v530
    %v778 = vsel %vm775, %v762, %v532
    %v779 = vsel %vm775, %v763, %v534
    %v780 = vsel %vm775, %v764, %v536
    %v781 = vsel %vm775, %v765, %v538
    %v782 = vsel %vm775, %v766, %v540
    %v783 = vsel %vm775, %v767, %v542
    %v784 = vsel %vm775, %v760, %v544
    %v785 = vsel %vm775, %v768, %v546
    %v786 = vsel %vm775, %v769, %v548
    %v787 = vsel %vm775, %v770, %v550
    %v788 = vsel %vm775, %v771, %v552
    %v789 = vsel %vm775, %v772, %v554
    %v790 = vsel %vm775, %v773, %v556
    %v791 = vsel %vm775, %v774, %v558
    %v792 = vsel %vm743, %v349, %v606
    %v793 = vsel %vm743, %v352, %v608
    %v794 = vsel %vm743, %v355, %v610
    %v795 = vsel %vm743, %v358, %v612
    %v796 = vsel %vm743, %v361, %v614
    %v797 = vsel %vm743, %v364, %v616
    %v798 = vsel %vm743, %v367, %v618
    %v799 = vsel %vm743, %v579, %v620
    %v800 = vsel %vm743, %v370, %v622
    %v801 = vsel %vm743, %v373, %v624
    %v802 = vsel %vm743, %v376, %v626
    %v803 = vsel %vm743, %v379, %v628
    %v804 = vsel %vm743, %v382, %v630
    %v805 = vsel %vm743, %v385, %v632
    %v806 = vsel %vm743, %v388, %v634
    %v807 = vsel %vm743, %v582, %v636
    %v808 = vsel %vm759, %v792, %v654
    %v809 = vsel %vm759, %v793, %v656
    %v810 = vsel %vm759, %v794, %v658
    %v811 = vsel %vm759, %v795, %v660
    %v812 = vsel %vm759, %v796, %v662
    %v813 = vsel %vm759, %v797, %v664
    %v814 = vsel %vm759, %v798, %v666
    %v815 = vsel %vm759, %v799, %v668
    %v816 = vsel %vm759, %v800, %v670
    %v817 = vsel %vm759, %v801, %v672
    %v818 = vsel %vm759, %v802, %v674
    %v819 = vsel %vm759, %v803, %v676
    %v820 = vsel %vm759, %v804, %v678
    %v821 = vsel %vm759, %v805, %v680
    %v822 = vsel %vm759, %v806, %v682
    %v823 = vsel %vm759, %v807, %v668
    %v824 = vsel %vm775, %v808, %v699
    %v825 = vsel %vm775, %v809, %v701
    %v826 = vsel %vm775, %v810, %v703
    %v827 = vsel %vm775, %v811, %v705
    %v828 = vsel %vm775, %v812, %v707
    %v829 = vsel %vm775, %v813, %v709
    %v830 = vsel %vm775, %v814, %v711
    %v831 = vsel %vm775, %v815, %v713
    %v832 = vsel %vm775, %v816, %v715
    %v833 = vsel %vm775, %v817, %v717
    %v834 = vsel %vm775, %v818, %v719
    %v835 = vsel %vm775, %v819, %v721
    %v836 = vsel %vm775, %v820, %v723
    %v837 = vsel %vm775, %v821, %v725
    %v838 = vsel %vm775, %v822, %v727
    %v839 = vsel %vm775, %v823, %v713
    %v840 = vld [vmem:[%s3] sm:$0xff]
    %v841 = vld [vmem:[%s3 + $0x8] sm:$0xff]
    %v842 = vld [vmem:[%s3 + $0x10] sm:$0xff]
    %v843 = vld [vmem:[%s3 + $0x18] sm:$0xff]
    %v844 = vld [vmem:[%s3 + $0x20] sm:$0xff]
    %v845 = vld [vmem:[%s3 + $0x28] sm:$0xff]
    %v846 = vld [vmem:[%s3 + $0x30] sm:$0xff]
    %v847 = vld [vmem:[%s3 + $0x38] sm:$0xff]
    %v848 = vld [vmem:[%s3 + $0x40] sm:$0xff]
    %v849 = vld [vmem:[%s3 + $0x48] sm:$0xff]
    %v850 = vld [vmem:[%s3 + $0x50] sm:$0xff]
    %v851 = vld [vmem:[%s3 + $0x58] sm:$0xff]
    %v852 = vld [vmem:[%s3 + $0x60] sm:$0xff]
    %v853 = vld [vmem:[%s3 + $0x68] sm:$0xff]
    %v854 = vld [vmem:[%s3 + $0x70] sm:$0xff]
    %v855 = vld [vmem:[%s3 + $0x78] sm:$0xff]
    %v856 = vld [vmem:[%s3 + $0x80] sm:$0xff]
    %v857 = vld [vmem:[%s3 + $0x88] sm:$0xff]
    %v858 = vld [vmem:[%s3 + $0x90] sm:$0xff]
    %v859 = vld [vmem:[%s3 + $0x98] sm:$0xff]
    %v860 = vld [vmem:[%s3 + $0xa0] sm:$0xff]
    %v861 = vld [vmem:[%s3 + $0xa8] sm:$0xff]
    %v862 = vld [vmem:[%s3 + $0xb0] sm:$0xff]
    %v863 = vld [vmem:[%s3 + $0xb8] sm:$0xff]
    %v864 = vld [vmem:[%s3 + $0xc0] sm:$0xff]
    %v865 = vld [vmem:[%s3 + $0xc8] sm:$0xff]
    %v866 = vld [vmem:[%s3 + $0xd0] sm:$0xff]
    %v867 = vld [vmem:[%s3 + $0xd8] sm:$0xff]
    %v868 = vld [vmem:[%s3 + $0xe0] sm:$0xff]
    %v869 = vld [vmem:[%s3 + $0xe8] sm:$0xff]
    %v870 = vld [vmem:[%s3 + $0xf0] sm:$0xff]
    %v871 = vld [vmem:[%s3 + $0xf8] sm:$0xff]
    %v872 = vld [vmem:[%s3 + $0x100] sm:$0xff]
    %v873 = vld [vmem:[%s3 + $0x108] sm:$0xff]
    %v874 = vld [vmem:[%s3 + $0x110] sm:$0xff]
    %v875 = vld [vmem:[%s3 + $0x118] sm:$0xff]
    %v876 = vld [vmem:[%s4] sm:$0x1]
    %v878 = vlaneseq
    %v879 = vshrl.u32 %v878, 7
    %v880 = vsub.s32 0, %v879
    %v881 = vrot.slane %v876, %v880
    %v883 = vsel %vm743, %v443, 0
    %v885 = vsel %vm743, %v446, 0
    %v887 = vsel %vm743, %v449, 0
    %v889 = vsel %vm743, %v452, 0
    %v891 = vsel %vm743, %v455, 0
    %v893 = vsel %vm743, %v458, 0
    %v895 = vsel %vm743, %v601, 0
    %v897 = vsel %vm743, %v437, 0
    %v899 = vsel %vm743, %v464, 0
    %v901 = vsel %vm743, %v467, 0
    %v903 = vsel %vm743, %v470, 0
    %v905 = vsel %vm743, %v473, 0
    %v907 = vsel %vm743, %v476, 0
    %v909 = vsel %vm743, %v479, 0
    %v911 = vsel %vm743, %v604, 0
    %913 = vmatprep.subr.mxu0 0.0
    %914 = vmatpush1.msra.mxu0 %v855
    %915 = vmatprep.subr.mxu0 0.0
    %916 = vmatpush1.msra.mxu0 %v854
    %917 = vmatprep.subr.mxu0 0.0
    %918 = vmatpush1.msra.mxu0 %v853
    %919 = vmatprep.subr.mxu0 0.0
    %920 = vmatpush1.msra.mxu0 %v852
    %921 = vmatprep.subr.mxu0 0.0
    %922 = vmatpush1.msra.mxu0 %v851
    %923 = vmatprep.subr.mxu0 0.0
    %924 = vmatpush1.msra.mxu0 %v850
    %925 = vmatprep.subr.mxu0 0.0
    %926 = vmatpush1.msra.mxu0 %v849
    %927 = vmatprep.subr.mxu0 0.0
    %928 = vmatpush1.msra.mxu0 %v848
    %929 = vmatprep.subr.mxu0 0.0
    %930 = vmatpush1.msra.mxu0 %v847
    %931 = vmatprep.subr.mxu0 0.0
    %932 = vmatpush1.msra.mxu0 %v846
    %933 = vmatprep.subr.mxu0 0.0
    %934 = vmatpush1.msra.mxu0 %v845
    %935 = vmatprep.subr.mxu0 0.0
    %936 = vmatpush1.msra.mxu0 %v844
    %937 = vmatprep.subr.mxu0 0.0
    %938 = vmatpush1.msra.mxu0 %v843
    %939 = vmatprep.subr.mxu0 0.0
    %940 = vmatpush1.msra.mxu0 %v842
    %941 = vmatprep.subr.mxu0 0.0
    %942 = vmatpush1.msra.mxu0 %v841
    %943 = vmatprep.subr.mxu0 0.0
    %944 = vmatpush1.msra.mxu0 %v840
    %945 = vmatprep.subr.mxu0 0.0
    %946 = vmatpush2.msra.mxu0 %v871
    %947 = vmatprep.subr.mxu0 0.0
    %948 = vmatpush2.msra.mxu0 %v870
    %949 = vmatprep.subr.mxu0 0.0
    %950 = vmatpush2.msra.mxu0 %v869
    %951 = vmatprep.subr.mxu0 0.0
    %952 = vmatpush2.msra.mxu0 %v868
    %953 = vmatprep.subr.mxu0 0.0
    %954 = vmatpush2.msra.mxu0 %v867
    %955 = vmatprep.subr.mxu0 0.0
    %956 = vmatpush2.msra.mxu0 %v866
    %957 = vmatprep.subr.mxu0 0.0
    %958 = vmatpush2.msra.mxu0 %v865
    %959 = vmatprep.subr.mxu0 0.0
    %960 = vmatpush2.msra.mxu0 %v864
    %961 = vmatprep.subr.mxu0 0.0
    %962 = vmatpush2.msra.mxu0 %v863
    %963 = vmatprep.subr.mxu0 0.0
    %964 = vmatpush2.msra.mxu0 %v862
    %965 = vmatprep.subr.mxu0 0.0
    %966 = vmatpush2.msra.mxu0 %v861
    %967 = vmatprep.subr.mxu0 0.0
    %968 = vmatpush2.msra.mxu0 %v860
    %969 = vmatprep.subr.mxu0 0.0
    %970 = vmatpush2.msra.mxu0 %v859
    %971 = vmatprep.subr.mxu0 0.0
    %972 = vmatpush2.msra.mxu0 %v858
    %973 = vmatprep.subr.mxu0 0.0
    %974 = vmatpush2.msra.mxu0 %v857
    %975 = vmatprep.subr.mxu0 0.0
    %976 = vmatpush2.msra.mxu0 %v856
    %977 = vmatprep.mubr.f32.mxu0 %v824
    %978 = vmatmul.mubr.f32.gmra.mxu0 %v776
    %v979 = vpop.f32.mrf.mxu0
    %v980 = vadd.f32 %v881, %v979
    %v981 = vpop.f32.mrf.mxu0
    %982 = vmatprep.mubr.f32.mxu0 %v825
    %983 = vmatmul.mubr.f32.gmra.mxu0 %v777
    %v984 = vpop.f32.mrf.mxu0
    %v985 = vadd.f32 %v881, %v984
    %v986 = vpop.f32.mrf.mxu0
    %987 = vmatprep.mubr.f32.mxu0 %v826
    %988 = vmatmul.mubr.f32.gmra.mxu0 %v778
    %v989 = vpop.f32.mrf.mxu0
    %v990 = vadd.f32 %v881, %v989
    %v991 = vpop.f32.mrf.mxu0
    %992 = vmatprep.mubr.f32.mxu0 %v827
    %993 = vmatmul.mubr.f32.gmra.mxu0 %v779
    %v994 = vpop.f32.mrf.mxu0
    %v995 = vadd.f32 %v881, %v994
    %v996 = vpop.f32.mrf.mxu0
    %997 = vmatprep.mubr.f32.mxu0 %v828
    %998 = vmatmul.mubr.f32.gmra.mxu0 %v780
    %v999 = vpop.f32.mrf.mxu0
    %v1000 = vadd.f32 %v881, %v999
    %v1001 = vpop.f32.mrf.mxu0
    %1002 = vmatprep.mubr.f32.mxu0 %v829
    %1003 = vmatmul.mubr.f32.gmra.mxu0 %v781
    %v1004 = vpop.f32.mrf.mxu0
    %v1005 = vadd.f32 %v881, %v1004
    %v1006 = vpop.f32.mrf.mxu0
    %1007 = vmatprep.mubr.f32.mxu0 %v830
    %1008 = vmatmul.mubr.f32.gmra.mxu0 %v782
    %v1009 = vpop.f32.mrf.mxu0
    %v1010 = vadd.f32 %v881, %v1009
    %v1011 = vpop.f32.mrf.mxu0
    %1012 = vmatprep.mubr.f32.mxu0 %v831
    %1013 = vmatmul.mubr.f32.gmra.mxu0 %v783
    %v1014 = vpop.f32.mrf.mxu0
    %v1015 = vadd.f32 %v881, %v1014
    %v1016 = vpop.f32.mrf.mxu0
    %1017 = vmatprep.mubr.f32.mxu0 %v832
    %1018 = vmatmul.mubr.f32.gmra.mxu0 %v784
    %v1019 = vpop.f32.mrf.mxu0
    %v1020 = vadd.f32 %v881, %v1019
    %v1021 = vpop.f32.mrf.mxu0
    %1022 = vmatprep.mubr.f32.mxu0 %v833
    %1023 = vmatmul.mubr.f32.gmra.mxu0 %v785
    %v1024 = vpop.f32.mrf.mxu0
    %v1025 = vadd.f32 %v881, %v1024
    %v1026 = vpop.f32.mrf.mxu0
    %1027 = vmatprep.mubr.f32.mxu0 %v834
    %1028 = vmatmul.mubr.f32.gmra.mxu0 %v786
    %v1029 = vpop.f32.mrf.mxu0
    %v1030 = vadd.f32 %v881, %v1029
    %v1031 = vpop.f32.mrf.mxu0
    %1032 = vmatprep.mubr.f32.mxu0 %v835
    %1033 = vmatmul.mubr.f32.gmra.mxu0 %v787
    %v1034 = vpop.f32.mrf.mxu0
    %v1035 = vadd.f32 %v881, %v1034
    %v1036 = vpop.f32.mrf.mxu0
    %1037 = vmatprep.mubr.f32.mxu0 %v836
    %1038 = vmatmul.mubr.f32.gmra.mxu0 %v788
    %v1039 = vpop.f32.mrf.mxu0
    %v1040 = vadd.f32 %v881, %v1039
    %v1041 = vpop.f32.mrf.mxu0
    %1042 = vmatprep.mubr.f32.mxu0 %v837
    %1043 = vmatmul.mubr.f32.gmra.mxu0 %v789
    %v1044 = vpop.f32.mrf.mxu0
    %v1045 = vadd.f32 %v881, %v1044
    %v1046 = vpop.f32.mrf.mxu0
    %1047 = vmatprep.mubr.f32.mxu0 %v838
    %1048 = vmatmul.mubr.f32.gmra.mxu0 %v790
    %v1049 = vpop.f32.mrf.mxu0
    %v1050 = vadd.f32 %v881, %v1049
    %v1051 = vpop.f32.mrf.mxu0
    %1052 = vmatprep.mubr.f32.mxu0 %v839
    %1053 = vmatmul.mubr.f32.gmra.mxu0 %v791
    %v1054 = vpop.f32.mrf.mxu0
    %v1055 = vadd.f32 %v881, %v1054
    %v1056 = vpop.f32.mrf.mxu0
    %1057 = vdwg.mxu0
    %1058 = vmatprep.subr.mxu0 0.0
    %1059 = vmatpush1.msra.mxu0 0.0
    %1060 = vmatprep.subr.mxu0 0.0
    %1061 = vmatpush1.msra.mxu0 0.0
    %1062 = vmatprep.subr.mxu0 0.0
    %1063 = vmatpush1.msra.mxu0 0.0
    %1064 = vmatprep.subr.mxu0 0.0
    %1065 = vmatpush1.msra.mxu0 0.0
    %1066 = vmatprep.subr.mxu0 0.0
    %1067 = vmatpush1.msra.mxu0 0.0
    %1068 = vmatprep.subr.mxu0 0.0
    %1069 = vmatpush1.msra.mxu0 0.0
    %1070 = vmatprep.subr.mxu0 0.0
    %1071 = vmatpush1.msra.mxu0 0.0
    %1072 = vmatprep.subr.mxu0 0.0
    %1073 = vmatpush1.msra.mxu0 0.0
    %1074 = vmatprep.subr.mxu0 0.0
    %1075 = vmatpush1.msra.mxu0 0.0
    %1076 = vmatprep.subr.mxu0 0.0
    %1077 = vmatpush1.msra.mxu0 0.0
    %1078 = vmatprep.subr.mxu0 0.0
    %1079 = vmatpush1.msra.mxu0 0.0
    %1080 = vmatprep.subr.mxu0 0.0
    %1081 = vmatpush1.msra.mxu0 0.0
    %1082 = vmatprep.subr.mxu0 0.0
    %1083 = vmatpush1.msra.mxu0 %v875
    %1084 = vmatprep.subr.mxu0 0.0
    %1085 = vmatpush1.msra.mxu0 %v874
    %1086 = vmatprep.subr.mxu0 0.0
    %1087 = vmatpush1.msra.mxu0 %v873
    %1088 = vmatprep.subr.mxu0 0.0
    %1089 = vmatpush1.msra.mxu0 %v872
    %1090 = vmatprep.subr.mxu0 0.0
    %1091 = vmatpush2.msra.mxu0 0.0
    %1092 = vmatprep.subr.mxu0 0.0
    %1093 = vmatpush2.msra.mxu0 0.0
    %1094 = vmatprep.subr.mxu0 0.0
    %1095 = vmatpush2.msra.mxu0 0.0
    %1096 = vmatprep.subr.mxu0 0.0
    %1097 = vmatpush2.msra.mxu0 0.0
    %1098 = vmatprep.subr.mxu0 0.0
    %1099 = vmatpush2.msra.mxu0 0.0
    %1100 = vmatprep.subr.mxu0 0.0
    %1101 = vmatpush2.msra.mxu0 0.0
    %1102 = vmatprep.subr.mxu0 0.0
    %1103 = vmatpush2.msra.mxu0 0.0
    %1104 = vmatprep.subr.mxu0 0.0
    %1105 = vmatpush2.msra.mxu0 0.0
    %1106 = vmatprep.subr.mxu0 0.0
    %1107 = vmatpush2.msra.mxu0 0.0
    %1108 = vmatprep.subr.mxu0 0.0
    %1109 = vmatpush2.msra.mxu0 0.0
    %1110 = vmatprep.subr.mxu0 0.0
    %1111 = vmatpush2.msra.mxu0 0.0
    %1112 = vmatprep.subr.mxu0 0.0
    %1113 = vmatpush2.msra.mxu0 0.0
    %1114 = vmatprep.subr.mxu0 0.0
    %1115 = vmatpush2.msra.mxu0 0.0
    %1116 = vmatprep.subr.mxu0 0.0
    %1117 = vmatpush2.msra.mxu0 0.0
    %1118 = vmatprep.subr.mxu0 0.0
    %1119 = vmatpush2.msra.mxu0 0.0
    %1120 = vmatprep.subr.mxu0 0.0
    %1121 = vmatpush2.msra.mxu0 0.0
    %1122 = vmatprep.mubr.f32.mxu0 0.0
    %1123 = vmatmul.mubr.f32.gmra.mxu0 %v883
    %v1124 = vpop.f32.mrf.mxu0
    %v1125 = vadd.f32 %v980, %v1124
    %v1126 = vpop.f32.mrf.mxu0
    %1127 = vmatprep.mubr.f32.mxu0 0.0
    %1128 = vmatmul.mubr.f32.gmra.mxu0 %v885
    %v1129 = vpop.f32.mrf.mxu0
    %v1130 = vadd.f32 %v985, %v1129
    %v1131 = vpop.f32.mrf.mxu0
    %1132 = vmatprep.mubr.f32.mxu0 0.0
    %1133 = vmatmul.mubr.f32.gmra.mxu0 %v887
    %v1134 = vpop.f32.mrf.mxu0
    %v1135 = vadd.f32 %v990, %v1134
    %v1136 = vpop.f32.mrf.mxu0
    %1137 = vmatprep.mubr.f32.mxu0 0.0
    %1138 = vmatmul.mubr.f32.gmra.mxu0 %v889
    %v1139 = vpop.f32.mrf.mxu0
    %v1140 = vadd.f32 %v995, %v1139
    %v1141 = vpop.f32.mrf.mxu0
    %1142 = vmatprep.mubr.f32.mxu0 0.0
    %1143 = vmatmul.mubr.f32.gmra.mxu0 %v891
    %v1144 = vpop.f32.mrf.mxu0
    %v1145 = vadd.f32 %v1000, %v1144
    %v1146 = vpop.f32.mrf.mxu0
    %1147 = vmatprep.mubr.f32.mxu0 0.0
    %1148 = vmatmul.mubr.f32.gmra.mxu0 %v893
    %v1149 = vpop.f32.mrf.mxu0
    %v1150 = vadd.f32 %v1005, %v1149
    %v1151 = vpop.f32.mrf.mxu0
    %1152 = vmatprep.mubr.f32.mxu0 0.0
    %1153 = vmatmul.mubr.f32.gmra.mxu0 %v895
    %v1154 = vpop.f32.mrf.mxu0
    %v1155 = vadd.f32 %v1010, %v1154
    %v1156 = vpop.f32.mrf.mxu0
    %1157 = vmatprep.mubr.f32.mxu0 0.0
    %1158 = vmatmul.mubr.f32.gmra.mxu0 %v897
    %v1159 = vpop.f32.mrf.mxu0
    %v1160 = vadd.f32 %v1015, %v1159
    %v1161 = vpop.f32.mrf.mxu0
    %1162 = vmatprep.mubr.f32.mxu0 0.0
    %1163 = vmatmul.mubr.f32.gmra.mxu0 %v899
    %v1164 = vpop.f32.mrf.mxu0
    %v1165 = vadd.f32 %v1020, %v1164
    %v1166 = vpop.f32.mrf.mxu0
    %1167 = vmatprep.mubr.f32.mxu0 0.0
    %1168 = vmatmul.mubr.f32.gmra.mxu0 %v901
    %v1169 = vpop.f32.mrf.mxu0
    %v1170 = vadd.f32 %v1025, %v1169
    %v1171 = vpop.f32.mrf.mxu0
    %1172 = vmatprep.mubr.f32.mxu0 0.0
    %1173 = vmatmul.mubr.f32.gmra.mxu0 %v903
    %v1174 = vpop.f32.mrf.mxu0
    %v1175 = vadd.f32 %v1030, %v1174
    %v1176 = vpop.f32.mrf.mxu0
    %1177 = vmatprep.mubr.f32.mxu0 0.0
    %1178 = vmatmul.mubr.f32.gmra.mxu0 %v905
    %v1179 = vpop.f32.mrf.mxu0
    %v1180 = vadd.f32 %v1035, %v1179
    %v1181 = vpop.f32.mrf.mxu0
    %1182 = vmatprep.mubr.f32.mxu0 0.0
    %1183 = vmatmul.mubr.f32.gmra.mxu0 %v907
    %v1184 = vpop.f32.mrf.mxu0
    %v1185 = vadd.f32 %v1040, %v1184
    %v1186 = vpop.f32.mrf.mxu0
    %1187 = vmatprep.mubr.f32.mxu0 0.0
    %1188 = vmatmul.mubr.f32.gmra.mxu0 %v909
    %v1189 = vpop.f32.mrf.mxu0
    %v1190 = vadd.f32 %v1045, %v1189
    %v1191 = vpop.f32.mrf.mxu0
    %1192 = vmatprep.mubr.f32.mxu0 0.0
    %1193 = vmatmul.mubr.f32.gmra.mxu0 %v911
    %v1194 = vpop.f32.mrf.mxu0
    %v1195 = vadd.f32 %v1050, %v1194
    %v1196 = vpop.f32.mrf.mxu0
    %1197 = vmatprep.mubr.f32.mxu0 0.0
    %1198 = vmatmul.mubr.f32.gmra.mxu0 %v897
    %v1199 = vpop.f32.mrf.mxu0
    %v1200 = vadd.f32 %v1055, %v1199
    %v1201 = vpop.f32.mrf.mxu0
    %1202 = vdwg.mxu0
    %v1203 = vmax.f32 %v1125, 0.0
    %v1204 = vmax.f32 %v1130, 0.0
    %v1205 = vmax.f32 %v1135, 0.0
    %v1206 = vmax.f32 %v1140, 0.0
    %v1207 = vmax.f32 %v1145, 0.0
    %v1208 = vmax.f32 %v1150, 0.0
    %v1209 = vmax.f32 %v1155, 0.0
    %v1210 = vmax.f32 %v1160, 0.0
    %v1211 = vmax.f32 %v1165, 0.0
    %v1212 = vmax.f32 %v1170, 0.0
    %v1213 = vmax.f32 %v1175, 0.0
    %v1214 = vmax.f32 %v1180, 0.0
    %v1215 = vmax.f32 %v1185, 0.0
    %v1216 = vmax.f32 %v1190, 0.0
    %v1217 = vmax.f32 %v1195, 0.0
    %v1218 = vmax.f32 %v1200, 0.0
    %v1219 = vld [vmem:[%s5] sm:$0xff]
    %v1220 = vld [vmem:[%s5 + $0x8] sm:$0xff]
    %v1221 = vld [vmem:[%s5 + $0x10] sm:$0xff]
    %v1222 = vld [vmem:[%s5 + $0x18] sm:$0xff]
    %v1223 = vld [vmem:[%s6] sm:$0x1]
    %v1225 = vlaneseq
    %v1226 = vshrl.u32 %v1225, 7
    %v1227 = vsub.s32 0, %v1226
    %v1228 = vrot.slane %v1223, %v1227
    %v1231 = vsel %vm743, %v1203, 0
    %v1234 = vsel %vm743, %v1204, 0
    %v1237 = vsel %vm743, %v1205, 0
    %v1240 = vsel %vm743, %v1206, 0
    %v1243 = vsel %vm743, %v1207, 0
    %v1246 = vsel %vm743, %v1208, 0
    %v1249 = vsel %vm743, %v1209, 0
    %v1252 = vsel %vm743, %v1210, 0
    %v1255 = vsel %vm743, %v1211, 0
    %v1258 = vsel %vm743, %v1212, 0
    %v1261 = vsel %vm743, %v1213, 0
    %v1264 = vsel %vm743, %v1214, 0
    %v1267 = vsel %vm743, %v1215, 0
    %v1270 = vsel %vm743, %v1216, 0
    %v1273 = vsel %vm743, %v1217, 0
    %v1276 = vsel %vm743, %v1218, 0
    %1278 = vmatprep.subr.mxu0 0.0
    %1279 = vmatpush1.msra.mxu0 0.0
    %1280 = vmatprep.subr.mxu0 0.0
    %1281 = vmatpush1.msra.mxu0 0.0
    %1282 = vmatprep.subr.mxu0 0.0
    %1283 = vmatpush1.msra.mxu0 0.0
    %1284 = vmatprep.subr.mxu0 0.0
    %1285 = vmatpush1.msra.mxu0 0.0
    %1286 = vmatprep.subr.mxu0 0.0
    %1287 = vmatpush1.msra.mxu0 0.0
    %1288 = vmatprep.subr.mxu0 0.0
    %1289 = vmatpush1.msra.mxu0 0.0
    %1290 = vmatprep.subr.mxu0 0.0
    %1291 = vmatpush1.msra.mxu0 0.0
    %1292 = vmatprep.subr.mxu0 0.0
    %1293 = vmatpush1.msra.mxu0 0.0
    %1294 = vmatprep.subr.mxu0 0.0
    %1295 = vmatpush1.msra.mxu0 0.0
    %1296 = vmatprep.subr.mxu0 0.0
    %1297 = vmatpush1.msra.mxu0 0.0
    %1298 = vmatprep.subr.mxu0 0.0
    %1299 = vmatpush1.msra.mxu0 0.0
    %1300 = vmatprep.subr.mxu0 0.0
    %1301 = vmatpush1.msra.mxu0 0.0
    %1302 = vmatprep.subr.mxu0 0.0
    %1303 = vmatpush1.msra.mxu0 %v1222
    %1304 = vmatprep.subr.mxu0 0.0
    %1305 = vmatpush1.msra.mxu0 %v1221
    %1306 = vmatprep.subr.mxu0 0.0
    %1307 = vmatpush1.msra.mxu0 %v1220
    %1308 = vmatprep.subr.mxu0 0.0
    %1309 = vmatpush1.msra.mxu0 %v1219
    %1310 = vmatprep.subr.mxu0 0.0
    %1311 = vmatpush2.msra.mxu0 0.0
    %1312 = vmatprep.subr.mxu0 0.0
    %1313 = vmatpush2.msra.mxu0 0.0
    %1314 = vmatprep.subr.mxu0 0.0
    %1315 = vmatpush2.msra.mxu0 0.0
    %1316 = vmatprep.subr.mxu0 0.0
    %1317 = vmatpush2.msra.mxu0 0.0
    %1318 = vmatprep.subr.mxu0 0.0
    %1319 = vmatpush2.msra.mxu0 0.0
    %1320 = vmatprep.subr.mxu0 0.0
    %1321 = vmatpush2.msra.mxu0 0.0
    %1322 = vmatprep.subr.mxu0 0.0
    %1323 = vmatpush2.msra.mxu0 0.0
    %1324 = vmatprep.subr.mxu0 0.0
    %1325 = vmatpush2.msra.mxu0 0.0
    %1326 = vmatprep.subr.mxu0 0.0
    %1327 = vmatpush2.msra.mxu0 0.0
    %1328 = vmatprep.subr.mxu0 0.0
    %1329 = vmatpush2.msra.mxu0 0.0
    %1330 = vmatprep.subr.mxu0 0.0
    %1331 = vmatpush2.msra.mxu0 0.0
    %1332 = vmatprep.subr.mxu0 0.0
    %1333 = vmatpush2.msra.mxu0 0.0
    %1334 = vmatprep.subr.mxu0 0.0
    %1335 = vmatpush2.msra.mxu0 0.0
    %1336 = vmatprep.subr.mxu0 0.0
    %1337 = vmatpush2.msra.mxu0 0.0
    %1338 = vmatprep.subr.mxu0 0.0
    %1339 = vmatpush2.msra.mxu0 0.0
    %1340 = vmatprep.subr.mxu0 0.0
    %1341 = vmatpush2.msra.mxu0 0.0
    %1342 = vmatprep.mubr.f32.mxu0 0.0
    %1343 = vmatmul.mubr.f32.gmra.mxu0 %v1231
    %v1344 = vpop.f32.mrf.mxu0
    %v1345 = vadd.f32 %v1228, %v1344
    %v1346 = vpop.f32.mrf.mxu0
    %1347 = vmatprep.mubr.f32.mxu0 0.0
    %1348 = vmatmul.mubr.f32.gmra.mxu0 %v1234
    %v1349 = vpop.f32.mrf.mxu0
    %v1350 = vadd.f32 %v1228, %v1349
    %v1351 = vpop.f32.mrf.mxu0
    %1352 = vmatprep.mubr.f32.mxu0 0.0
    %1353 = vmatmul.mubr.f32.gmra.mxu0 %v1237
    %v1354 = vpop.f32.mrf.mxu0
    %v1355 = vadd.f32 %v1228, %v1354
    %v1356 = vpop.f32.mrf.mxu0
    %1357 = vmatprep.mubr.f32.mxu0 0.0
    %1358 = vmatmul.mubr.f32.gmra.mxu0 %v1240
    %v1359 = vpop.f32.mrf.mxu0
    %v1360 = vadd.f32 %v1228, %v1359
    %v1361 = vpop.f32.mrf.mxu0
    %1362 = vmatprep.mubr.f32.mxu0 0.0
    %1363 = vmatmul.mubr.f32.gmra.mxu0 %v1243
    %v1364 = vpop.f32.mrf.mxu0
    %v1365 = vadd.f32 %v1228, %v1364
    %v1366 = vpop.f32.mrf.mxu0
    %1367 = vmatprep.mubr.f32.mxu0 0.0
    %1368 = vmatmul.mubr.f32.gmra.mxu0 %v1246
    %v1369 = vpop.f32.mrf.mxu0
    %v1370 = vadd.f32 %v1228, %v1369
    %v1371 = vpop.f32.mrf.mxu0
    %1372 = vmatprep.mubr.f32.mxu0 0.0
    %1373 = vmatmul.mubr.f32.gmra.mxu0 %v1249
    %v1374 = vpop.f32.mrf.mxu0
    %v1375 = vadd.f32 %v1228, %v1374
    %v1376 = vpop.f32.mrf.mxu0
    %1377 = vmatprep.mubr.f32.mxu0 0.0
    %1378 = vmatmul.mubr.f32.gmra.mxu0 %v1252
    %v1379 = vpop.f32.mrf.mxu0
    %v1380 = vadd.f32 %v1228, %v1379
    %v1381 = vpop.f32.mrf.mxu0
    %1382 = vmatprep.mubr.f32.mxu0 0.0
    %1383 = vmatmul.mubr.f32.gmra.mxu0 %v1255
    %v1384 = vpop.f32.mrf.mxu0
    %v1385 = vadd.f32 %v1228, %v1384
    %v1386 = vpop.f32.mrf.mxu0
    %1387 = vmatprep.mubr.f32.mxu0 0.0
    %1388 = vmatmul.mubr.f32.gmra.mxu0 %v1258
    %v1389 = vpop.f32.mrf.mxu0
    %v1390 = vadd.f32 %v1228, %v1389
    %v1391 = vpop.f32.mrf.mxu0
    %1392 = vmatprep.mubr.f32.mxu0 0.0
    %1393 = vmatmul.mubr.f32.gmra.mxu0 %v1261
    %v1394 = vpop.f32.mrf.mxu0
    %v1395 = vadd.f32 %v1228, %v1394
    %v1396 = vpop.f32.mrf.mxu0
    %1397 = vmatprep.mubr.f32.mxu0 0.0
    %1398 = vmatmul.mubr.f32.gmra.mxu0 %v1264
    %v1399 = vpop.f32.mrf.mxu0
    %v1400 = vadd.f32 %v1228, %v1399
    %v1401 = vpop.f32.mrf.mxu0
    %1402 = vmatprep.mubr.f32.mxu0 0.0
    %1403 = vmatmul.mubr.f32.gmra.mxu0 %v1267
    %v1404 = vpop.f32.mrf.mxu0
    %v1405 = vadd.f32 %v1228, %v1404
    %v1406 = vpop.f32.mrf.mxu0
    %1407 = vmatprep.mubr.f32.mxu0 0.0
    %1408 = vmatmul.mubr.f32.gmra.mxu0 %v1270
    %v1409 = vpop.f32.mrf.mxu0
    %v1410 = vadd.f32 %v1228, %v1409
    %v1411 = vpop.f32.mrf.mxu0
    %1412 = vmatprep.mubr.f32.mxu0 0.0
    %1413 = vmatmul.mubr.f32.gmra.mxu0 %v1273
    %v1414 = vpop.f32.mrf.mxu0
    %v1415 = vadd.f32 %v1228, %v1414
    %v1416 = vpop.f32.mrf.mxu0
    %1417 = vmatprep.mubr.f32.mxu0 0.0
    %1418 = vmatmul.mubr.f32.gmra.mxu0 %v1276
    %v1419 = vpop.f32.mrf.mxu0
    %v1420 = vadd.f32 %v1228, %v1419
    %v1421 = vpop.f32.mrf.mxu0
    %1422 = vdwg.mxu0
    %v1423 = vadd.f32 %v1345, %v27
    %v1424 = vadd.f32 %v1350, %v28
    %v1425 = vadd.f32 %v1355, %v29
    %v1426 = vadd.f32 %v1360, %v30
    %v1427 = vadd.f32 %v1365, %v31
    %v1428 = vadd.f32 %v1370, %v32
    %v1429 = vadd.f32 %v1375, %v33
    %v1430 = vadd.f32 %v1380, %v34
    %v1431 = vadd.f32 %v1385, %v35
    %v1432 = vadd.f32 %v1390, %v36
    %v1433 = vadd.f32 %v1395, %v37
    %v1434 = vadd.f32 %v1400, %v38
    %v1435 = vadd.f32 %v1405, %v39
    %v1436 = vadd.f32 %v1410, %v40
    %v1437 = vadd.f32 %v1415, %v41
    %v1438 = vadd.f32 %v1420, %v42
    %v1439 = vmax.f32 %v1423, 0.0
    %v1440 = vmax.f32 %v1424, 0.0
    %v1441 = vmax.f32 %v1425, 0.0
    %v1442 = vmax.f32 %v1426, 0.0
    %v1443 = vmax.f32 %v1427, 0.0
    %v1444 = vmax.f32 %v1428, 0.0
    %v1445 = vmax.f32 %v1429, 0.0
    %v1446 = vmax.f32 %v1430, 0.0
    %v1447 = vmax.f32 %v1431, 0.0
    %v1448 = vmax.f32 %v1432, 0.0
    %v1449 = vmax.f32 %v1433, 0.0
    %v1450 = vmax.f32 %v1434, 0.0
    %v1451 = vmax.f32 %v1435, 0.0
    %v1452 = vmax.f32 %v1436, 0.0
    %v1453 = vmax.f32 %v1437, 0.0
    %v1454 = vmax.f32 %v1438, 0.0
    %1455 = vst [vmem:[#allocation2] sm:$0xff] %v1439
    %1456 = vst [vmem:[#allocation2 + $0x8] sm:$0xff] %v1440
    %1457 = vst [vmem:[#allocation2 + $0x10] sm:$0xff] %v1441
    %1458 = vst [vmem:[#allocation2 + $0x18] sm:$0xff] %v1442
    %1459 = vst [vmem:[#allocation2 + $0x20] sm:$0xff] %v1443
    %1460 = vst [vmem:[#allocation2 + $0x28] sm:$0xff] %v1444
    %1461 = vst [vmem:[#allocation2 + $0x30] sm:$0xff] %v1445
    %1462 = vst [vmem:[#allocation2 + $0x38] sm:$0xff] %v1446
    %1463 = vst [vmem:[#allocation2 + $0x40] sm:$0xff] %v1447
    %1464 = vst [vmem:[#allocation2 + $0x48] sm:$0xff] %v1448
    %1465 = vst [vmem:[#allocation2 + $0x50] sm:$0xff] %v1449
    %1466 = vst [vmem:[#allocation2 + $0x58] sm:$0xff] %v1450
    %1467 = vst [vmem:[#allocation2 + $0x60] sm:$0xff] %v1451
    %1468 = vst [vmem:[#allocation2 + $0x68] sm:$0xff] %v1452
    %1469 = vst [vmem:[#allocation2 + $0x70] sm:$0xff] %v1453
    %1470 = vst [vmem:[#allocation2 + $0x78] sm:$0xff] %v1454
    // Predicated region
    $region30: #{tpu_custom_call.1} parent=1 // pred_check
      _
    $region31: #{tpu_custom_call.1} parent=1 // pred_check_branch
      %1472 = sbr.rel (0) target = $region33
    $region32: #{tpu_custom_call.1} parent=1 // pred_region
      %s1474 = ssub.s32 2048, 2048
      %1475 = vsyncadd [#allocation3], %s1474
      %s1476 = sshll.u32 [#allocation2], 4
      %s1477 = int_to_ptr.vmem [resolvable:$true] %s1476
      %1482 = dma.vmem_to_hbm [thread:$0]  %s1477, 2048, %s7, [#allocation3], 128, 128, 8
    $region33: #{tpu_custom_call.1} parent=1 // pred_fallthru
      _
    // Predicated region
    $region34: #{tpu_custom_call.1} parent=1 // pred_check
      _
    $region35: #{tpu_custom_call.1} parent=1 // pred_check_branch
      %1484 = sbr.rel (0) target = $region37
    $region36: #{tpu_custom_call.1} parent=1 // pred_region
      %1485 = dma.done [#allocation3], 2048
    $region37: #{tpu_custom_call.1} parent=1 // pred_fallthru
      _
    %1486 = vsyncpa [#allocation3], 1

</llo_original>
